<compile_context>
chip_gen: v6e
topology: v6e:2x2x1
jax: 0.10.0
libtpu: 0.0.40
codegen_flags: <defaults>
</compile_context>

<pallas_src>
import functools

import jax
import jax.numpy as jnp
from jax import lax
from jax.experimental import pallas as pl
from jax.experimental.pallas import tpu as pltpu


def _round_up(x, m):
    return ((x + m - 1) // m) * m


# ----------------------------------------------------------------------------
# Fused kernel: all LSTM layers + linear head in one pallas_call.
#   grid = (num_layers,)  (sequential, "arbitrary")
#   The layer input/output sequence is kept time-major in VMEM scratch and
#   overwritten in place layer after layer.
# ----------------------------------------------------------------------------
def _fused_lstm_kernel(x_ref, wih_ref, whh_ref, b_ref, wlin_ref, blin_ref,
                       y_ref, seq_scr, gates_scr, h_scr, c_scr,
                       *, T, Bp, Hp, Fp, horizon, mxu_dtype):
    # x_ref:    (T, Bp, Fp)    padded time-major input (only used at layer 0)
    # wih_ref:  (1, Fp, 4Hp)   this layer's input->hidden weights, gates [i,f,o,g]
    # whh_ref:  (1, Hp, 4Hp)   this layer's hidden->hidden weights
    # b_ref:    (1, 1, 4Hp)    combined bias (b_ih + b_hh), reordered/padded
    # wlin_ref: (Hp, Op)       linear head weights (transposed, padded)
    # blin_ref: (1, Op)        linear head bias
    # y_ref:    (horizon, Bp, Op)  final output (written only on last layer)
    # seq_scr:  (T, Bp, Fp)    inter-layer sequence (VMEM resident)
    # gates_scr:(T, Bp, 4Hp)   precomputed x @ W_ih + b for all timesteps
    # h_scr/c_scr: (Bp, Hp)    recurrent state (f32)
    layer = pl.program_id(0)
    num_layers = pl.num_programs(0)

    # Layer 0: bring the padded input sequence into the VMEM inter-layer buffer.
    @pl.when(layer == 0)
    def _():
        seq_scr[...] = x_ref[...]

    # ---- Hoisted input projection: one big MXU GEMM for all timesteps. ----
    w_ih = wih_ref[0]                                            # (Fp, 4Hp)
    x_all = seq_scr[...].reshape(T * Bp, Fp).astype(mxu_dtype)
    xw = jnp.dot(x_all, w_ih, preferred_element_type=jnp.float32)
    gates_scr[...] = xw.reshape(T, Bp, 4 * Hp) + b_ref[...]      # bias folded once

    # ---- Serial recurrence: only h @ W_hh + precomputed gates per step. ----
    w_hh = whh_ref[0]                                            # loop-invariant
    h_scr[...] = jnp.zeros_like(h_scr)
    c_scr[...] = jnp.zeros_like(c_scr)

    def step(t, carry):
        gates = gates_scr[t] + jnp.dot(
            h_scr[...].astype(mxu_dtype), w_hh,
            preferred_element_type=jnp.float32)                  # (Bp, 4Hp)
        # gate columns packed as [i | f | o | g]: sigmoid gates contiguous.
        sig = jax.nn.sigmoid(gates[:, :3 * Hp])
        i_g = sig[:, 0 * Hp:1 * Hp]
        f_g = sig[:, 1 * Hp:2 * Hp]
        o_g = sig[:, 2 * Hp:3 * Hp]
        g_g = jnp.tanh(gates[:, 3 * Hp:])
        c_new = f_g * c_scr[...] + i_g * g_g
        h_new = o_g * jnp.tanh(c_new)
        c_scr[...] = c_new
        h_scr[...] = h_new
        # overwrite this layer's input with its output for the next layer
        if Fp == Hp:
            seq_scr[t] = h_new
        else:
            seq_scr[t, :, :Hp] = h_new
        return carry

    # Fully unrolled here (T is small); use a partial factor (4-8) for long T.
    lax.fori_loop(0, T, step, 0, unroll=True)

    # ---- Epilogue on the last layer: linear head on the last `horizon` steps.
    @pl.when(layer == num_layers - 1)
    def _():
        hs = seq_scr[T - horizon:T, :, 0:Hp]                     # (horizon, Bp, Hp)
        hs2 = hs.reshape(horizon * Bp, Hp).astype(mxu_dtype)
        y = jnp.dot(hs2, wlin_ref[...], preferred_element_type=jnp.float32)
        y_ref[...] = y.reshape(horizon, Bp, y_ref.shape[-1]) + blin_ref[...]


# ----------------------------------------------------------------------------
# Wrapper: pad / transpose once at entry, one pallas_call, un-pad at exit.
# ----------------------------------------------------------------------------
def lstm_model_forward(X, prepared, horizon):
    """X: (B, T, input_dim) batch_first -> (B, horizon, output_dim)."""
    dims = prepared["dims"]
    Hp, Fp, Op, L = dims["Hp"], dims["Fp"], dims["Op"], dims["L"]
    out_dim = dims["output_dim"]
    mxu_dtype = prepared["mxu_dtype"]

    B, T, Din = X.shape
    Bp = _round_up(B, 8)

    # single entry transpose + pad to tile-shaped (T, Bp, Fp)
    x = jnp.transpose(X.astype(jnp.float32), (1, 0, 2))
    x = jnp.pad(x, ((0, 0), (0, Bp - B), (0, Fp - Din)))

    kernel = functools.partial(
        _fused_lstm_kernel, T=T, Bp=Bp, Hp=Hp, Fp=Fp,
        horizon=horizon, mxu_dtype=mxu_dtype)

    # rough VMEM budget (blocks are double-buffered) -> explicit limit,
    # clamped so it never goes below the default scoped limit.
    wbytes = jnp.dtype(mxu_dtype).itemsize
    vmem_est = (
        2 * T * Bp * Fp * 4                                     # x block
        + 2 * (Fp * 4 * Hp + Hp * 4 * Hp + Hp * Op) * wbytes    # weight blocks
        + 2 * (4 * Hp + Op) * 4                                 # bias blocks
        + 2 * horizon * Bp * Op * 4                             # output block
        + T * Bp * (Fp + 4 * Hp) * 4                            # seq + gates scratch
        + 2 * Bp * Hp * 4)                                      # h, c scratch
    vmem_limit = int(min(max(2 * vmem_est, 32 * 1024 * 1024), 128 * 1024 * 1024))

    grid_spec = pltpu.PrefetchScalarGridSpec(
        num_scalar_prefetch=0,
        grid=(L,),
        in_specs=[
            pl.BlockSpec((T, Bp, Fp), lambda l: (0, 0, 0)),        # x (layer 0)
            pl.BlockSpec((1, Fp, 4 * Hp), lambda l: (l, 0, 0)),    # W_ih[l]
            pl.BlockSpec((1, Hp, 4 * Hp), lambda l: (l, 0, 0)),    # W_hh[l]
            pl.BlockSpec((1, 1, 4 * Hp), lambda l: (l, 0, 0)),     # b[l]
            pl.BlockSpec((Hp, Op), lambda l: (0, 0)),              # W_lin
            pl.BlockSpec((1, Op), lambda l: (0, 0)),               # b_lin
        ],
        out_specs=pl.BlockSpec((horizon, Bp, Op), lambda l: (0, 0, 0)),
        scratch_shapes=[
            pltpu.VMEM((T, Bp, Fp), jnp.float32),       # inter-layer sequence
            pltpu.VMEM((T, Bp, 4 * Hp), jnp.float32),   # precomputed gates
            pltpu.VMEM((Bp, Hp), jnp.float32),          # h_t
            pltpu.VMEM((Bp, Hp), jnp.float32),          # c_t
        ],
    )

    y = pl.pallas_call(
        kernel,
        out_shape=jax.ShapeDtypeStruct((horizon, Bp, Op), jnp.float32),
        grid_spec=grid_spec,
        compiler_params=pltpu.CompilerParams(
            # layer axis is a true recurrence -> "arbitrary".  For large batch
            # on v7x (2 TensorCores) add a leading "parallel" batch-tile axis.
            dimension_semantics=("arbitrary",),
            vmem_limit_bytes=vmem_limit,
        ),
    )(x, prepared["w_ih"], prepared["w_hh"], prepared["b"],
      prepared["w_lin"], prepared["b_lin"])

    # back to batch_first, strip padding
    return jnp.transpose(y, (1, 0, 2))[:B, :, :out_dim]


# ----------------------------------------------------------------------------
# Parameter handling.
# init_params produces PyTorch-layout weights (gate order i, f, g, o);
# prepare_params packs them into the padded / reordered / stacked kernel form.
# ----------------------------------------------------------------------------
def init_params(key, input_dim, hidden_dim, output_dim, num_layers):
    bound = float(hidden_dim) ** -0.5
    layers = []
    for layer in range(num_layers):
        in_dim = input_dim if layer == 0 else hidden_dim
        key, k1, k2, k3, k4 = jax.random.split(key, 5)
        layers.append(dict(
            w_ih=jax.random.uniform(k1, (4 * hidden_dim, in_dim), jnp.float32,
                                    -bound, bound),
            w_hh=jax.random.uniform(k2, (4 * hidden_dim, hidden_dim), jnp.float32,
                                    -bound, bound),
            b_ih=jax.random.uniform(k3, (4 * hidden_dim,), jnp.float32,
                                    -bound, bound),
            b_hh=jax.random.uniform(k4, (4 * hidden_dim,), jnp.float32,
                                    -bound, bound)))
    key, k5, k6 = jax.random.split(key, 3)
    w_lin = jax.random.uniform(k5, (output_dim, hidden_dim), jnp.float32,
                               -bound, bound)
    b_lin = jax.random.uniform(k6, (output_dim,), jnp.float32, -bound, bound)
    return {"lstm": layers, "w_lin": w_lin, "b_lin": b_lin}


def prepare_params(torch_params, input_dim, hidden_dim, output_dim,
                   mxu_dtype=jnp.bfloat16):
    H = hidden_dim
    Hp = _round_up(H, 128)                       # lane-padded hidden dim
    Fp = _round_up(max(input_dim, H), 128)       # common padded feature dim
    Op = _round_up(output_dim, 128)              # lane-padded output dim
    L = len(torch_params["lstm"])

    def pack_gates(w_t, in_dim, rows_to):
        # w_t: (in_dim, 4H), torch gate order [i|f|g|o] -> [i|f|o|g], padded.
        gi, gf, gg, go = jnp.split(w_t, 4, axis=1)
        blocks = [jnp.pad(blk, ((0, rows_to - in_dim), (0, Hp - H)))
                  for blk in (gi, gf, go, gg)]
        return jnp.concatenate(blocks, axis=1)   # (rows_to, 4Hp)

    wih_list, whh_list, b_list = [], [], []
    for lp in torch_params["lstm"]:
        in_dim = lp["w_ih"].shape[1]
        wih_list.append(pack_gates(lp["w_ih"].T, in_dim, Fp))
        whh_list.append(pack_gates(lp["w_hh"].T, H, Hp))
        b = lp["b_ih"] + lp["b_hh"]
        bi, bf, bg, bo = jnp.split(b, 4)
        b_r = jnp.concatenate([jnp.pad(bi, (0, Hp - H)), jnp.pad(bf, (0, Hp - H)),
                               jnp.pad(bo, (0, Hp - H)), jnp.pad(bg, (0, Hp - H))])
        b_list.append(b_r[None, :])

    return {
        "w_ih": jnp.stack(wih_list).astype(mxu_dtype),     # (L, Fp, 4Hp)
        "w_hh": jnp.stack(whh_list).astype(mxu_dtype),     # (L, Hp, 4Hp)
        "b": jnp.stack(b_list).astype(jnp.float32),        # (L, 1, 4Hp)
        "w_lin": jnp.pad(torch_params["w_lin"].T,
                         ((0, Hp - H), (0, Op - output_dim))).astype(mxu_dtype),
        "b_lin": jnp.pad(torch_params["b_lin"],
                         (0, Op - output_dim))[None, :].astype(jnp.float32),
        "dims": dict(input_dim=input_dim, hidden_dim=hidden_dim,
                     output_dim=output_dim, Hp=Hp, Fp=Fp, Op=Op, L=L),
        "mxu_dtype": mxu_dtype,
    }


# ----------------------------------------------------------------------------
# Pure-JAX reference (correctness only).  `mxu_dtype` mirrors the kernel's
# matmul-operand precision (bf16 products, f32 accumulation, f32 gate math);
# passing jnp.float32 gives the strict PyTorch-f32 semantics.
# ----------------------------------------------------------------------------
def ref_forward(X, torch_params, horizon, mxu_dtype=jnp.bfloat16):
    def mm(a, b):
        return jnp.dot(a.astype(mxu_dtype), b.astype(mxu_dtype),
                       preferred_element_type=jnp.float32)

    h_seq = X.astype(jnp.float32)
    B = h_seq.shape[0]
    for lp in torch_params["lstm"]:
        H = lp["w_hh"].shape[1]
        w_ih, w_hh = lp["w_ih"].T, lp["w_hh"].T
        b = (lp["b_ih"] + lp["b_hh"])[None, :]

        def cell(carry, x_t, w_ih=w_ih, w_hh=w_hh, b=b, H=H):
            h, c = carry
            gates = mm(x_t, w_ih) + mm(h, w_hh) + b
            i = jax.nn.sigmoid(gates[:, 0 * H:1 * H])
            f = jax.nn.sigmoid(gates[:, 1 * H:2 * H])
            g = jnp.tanh(gates[:, 2 * H:3 * H])
            o = jax.nn.sigmoid(gates[:, 3 * H:4 * H])
            c = f * c + i * g
            h = o * jnp.tanh(c)
            return (h, c), h

        init = (jnp.zeros((B, H), jnp.float32), jnp.zeros((B, H), jnp.float32))
        _, hs = lax.scan(cell, init, jnp.transpose(h_seq, (1, 0, 2)))
        h_seq = jnp.transpose(hs, (1, 0, 2))

    out_vec = h_seq[:, -horizon:, :]
    return mm(out_vec, torch_params["w_lin"].T) + torch_params["b_lin"]


if __name__ == "__main__":
    batch = 4
    window = 8          # sequence length
    input_dim = 8
    hidden_dim = 32
    output_dim = 16
    num_layers = 2
    horizon = 3

    key = jax.random.PRNGKey(0)
    key, kx, kp = jax.random.split(key, 3)
    X = jax.random.normal(kx, (batch, window, input_dim), jnp.float32)
    torch_params = init_params(kp, input_dim, hidden_dim, output_dim, num_layers)
    prepared = prepare_params(torch_params, input_dim, hidden_dim, output_dim,
                              mxu_dtype=jnp.bfloat16)

    out = jax.block_until_ready(lstm_model_forward(X, prepared, horizon))
    assert out.shape == (batch, horizon, output_dim), out.shape

    # 1) tight check vs a reference using the same matmul precision policy
    ref_mx = jax.block_until_ready(
        ref_forward(X, torch_params, horizon, mxu_dtype=jnp.bfloat16))
    assert jnp.allclose(out, ref_mx, rtol=1e-3, atol=1e-4), (
        f"max abs diff vs matched-precision ref: "
        f"{jnp.max(jnp.abs(out - ref_mx))}")

    # 2) loose check vs strict-f32 PyTorch semantics (absorbs the deliberate
    #    bf16 MXU-operand cast recommended for v6e/v7x)
    ref_f32 = jax.block_until_ready(
        ref_forward(X, torch_params, horizon, mxu_dtype=jnp.float32))
    assert jnp.allclose(out, ref_f32, rtol=5e-2, atol=5e-2), (
        f"max abs diff vs f32 ref: {jnp.max(jnp.abs(out - ref_f32))}")

    print("KERNEL_OK")
</pallas_src>

<mosaic_0001>
module attributes {stable_mosaic.version = 11 : i64} {
  func.func @_fused_lstm_kernel(%arg0: i32, %arg1: memref<8x8x128xf32, #tpu.memory_space<vmem>>, %arg2: memref<1x128x512xbf16, #tpu.memory_space<vmem>>, %arg3: memref<1x128x512xbf16, #tpu.memory_space<vmem>>, %arg4: memref<1x1x512xf32, #tpu.memory_space<vmem>>, %arg5: memref<128x128xbf16, #tpu.memory_space<vmem>>, %arg6: memref<1x128xf32, #tpu.memory_space<vmem>>, %arg7: memref<3x8x128xf32, #tpu.memory_space<vmem>>, %arg8: memref<8x8x128xf32, #tpu.memory_space<vmem>>, %arg9: memref<8x8x512xf32, #tpu.memory_space<vmem>>, %arg10: memref<8x128xf32, #tpu.memory_space<vmem>>, %arg11: memref<8x128xf32, #tpu.memory_space<vmem>>) attributes {dimension_semantics = [#tpu.dimension_semantics<arbitrary>], iteration_bounds = array<i64: 2>, scalar_prefetch = 0 : i64, scratch_operands = 4 : i64, tpu.core_type = #tpu.core_type<tc>, window_params = [{pipeline_mode = #tpu.pipeline_mode<synchronous>, transform_indices = @transform_0, window_bounds = array<i64: 8, 8, 128>}, {transform_indices = @transform_1, window_bounds = array<i64: 1, 128, 512>}, {transform_indices = @transform_2, window_bounds = array<i64: 1, 128, 512>}, {transform_indices = @transform_3, window_bounds = array<i64: 1, 1, 512>}, {pipeline_mode = #tpu.pipeline_mode<synchronous>, transform_indices = @transform_4, window_bounds = array<i64: 128, 128>}, {pipeline_mode = #tpu.pipeline_mode<synchronous>, transform_indices = @transform_5, window_bounds = array<i64: 1, 128>}, {pipeline_mode = #tpu.pipeline_mode<synchronous>, transform_indices = @transform_6, window_bounds = array<i64: 3, 8, 128>}]} {
    %c0_i32 = arith.constant 0 : i32
    %0 = arith.cmpi eq, %arg0, %c0_i32 : i32
    %1 = arith.extui %0 : i1 to i32
    %c0_i32_0 = arith.constant 0 : i32
    %2 = arith.cmpi ne, %1, %c0_i32_0 : i32
    scf.if %2 {
      %c0_136 = arith.constant 0 : index
      %c0_137 = arith.constant 0 : index
      %c0_138 = arith.constant 0 : index
      %263 = vector.load %arg1[%c0_136, %c0_137, %c0_138] : memref<8x8x128xf32, #tpu.memory_space<vmem>>, vector<8x8x128xf32>
      %c0_139 = arith.constant 0 : index
      %c0_140 = arith.constant 0 : index
      %c0_141 = arith.constant 0 : index
      %264 = vector.load %arg8[%c0_139, %c0_140, %c0_141] : memref<8x8x128xf32, #tpu.memory_space<vmem>>, vector<8x8x128xf32>
      tpu.vector_store %arg8[%c0_139, %c0_140, %c0_141], %263 {strides = array<i32>} : memref<8x8x128xf32, #tpu.memory_space<vmem>>, vector<8x8x128xf32>,
    } else {
    }
    %c0 = arith.constant 0 : index
    %c0_1 = arith.constant 0 : index
    %c0_2 = arith.constant 0 : index
    %3 = vector.load %arg2[%c0, %c0_1, %c0_2] : memref<1x128x512xbf16, #tpu.memory_space<vmem>>, vector<1x128x512xbf16>
    %4 = vector.shape_cast %3 : vector<1x128x512xbf16> to vector<128x512xbf16>
    %c0_3 = arith.constant 0 : index
    %c0_4 = arith.constant 0 : index
    %c0_5 = arith.constant 0 : index
    %5 = vector.load %arg8[%c0_3, %c0_4, %c0_5] : memref<8x8x128xf32, #tpu.memory_space<vmem>>, vector<8x8x128xf32>
    %6 = vector.shape_cast %5 : vector<8x8x128xf32> to vector<64x128xf32>
    %7 = arith.truncf %6 : vector<64x128xf32> to vector<64x128xbf16>
    %cst = arith.constant dense<0.000000e+00> : vector<64x512xf32>
    %8 = tpu.matmul %7, %4, %cst {dimension_numbers = #tpu.dot_dimension_numbers<[1], [0], [0], [1], [0, 0, 1, 1], [], []>} : vector<64x128xbf16>, vector<128x512xbf16>, vector<64x512xf32> -> vector<64x512xf32>
    %9 = vector.shape_cast %8 : vector<64x512xf32> to vector<8x8x512xf32>
    %c0_6 = arith.constant 0 : index
    %c0_7 = arith.constant 0 : index
    %c0_8 = arith.constant 0 : index
    %10 = vector.load %arg4[%c0_6, %c0_7, %c0_8] : memref<1x1x512xf32, #tpu.memory_space<vmem>>, vector<1x1x512xf32>
    %11 = vector.broadcast %10 : vector<1x1x512xf32> to vector<8x8x512xf32>
    %12 = arith.addf %9, %11 : vector<8x8x512xf32>
    %c0_9 = arith.constant 0 : index
    %c0_10 = arith.constant 0 : index
    %c0_11 = arith.constant 0 : index
    %13 = vector.load %arg9[%c0_9, %c0_10, %c0_11] : memref<8x8x512xf32, #tpu.memory_space<vmem>>, vector<8x8x512xf32>
    tpu.vector_store %arg9[%c0_9, %c0_10, %c0_11], %12 {strides = array<i32>} : memref<8x8x512xf32, #tpu.memory_space<vmem>>, vector<8x8x512xf32>,
    %c0_12 = arith.constant 0 : index
    %c0_13 = arith.constant 0 : index
    %c0_14 = arith.constant 0 : index
    %14 = vector.load %arg3[%c0_12, %c0_13, %c0_14] : memref<1x128x512xbf16, #tpu.memory_space<vmem>>, vector<1x128x512xbf16>
    %15 = vector.shape_cast %14 : vector<1x128x512xbf16> to vector<128x512xbf16>
    %cst_15 = arith.constant 0.000000e+00 : f32
    %16 = vector.broadcast %cst_15 : f32 to vector<8x128xf32>
    %c0_16 = arith.constant 0 : index
    %c0_17 = arith.constant 0 : index
    %17 = vector.load %arg10[%c0_16, %c0_17] : memref<8x128xf32, #tpu.memory_space<vmem>>, vector<8x128xf32>
    tpu.vector_store %arg10[%c0_16, %c0_17], %16 {strides = array<i32>} : memref<8x128xf32, #tpu.memory_space<vmem>>, vector<8x128xf32>,
    %cst_18 = arith.constant 0.000000e+00 : f32
    %18 = vector.broadcast %cst_18 : f32 to vector<8x128xf32>
    %c0_19 = arith.constant 0 : index
    %c0_20 = arith.constant 0 : index
    %19 = vector.load %arg11[%c0_19, %c0_20] : memref<8x128xf32, #tpu.memory_space<vmem>>, vector<8x128xf32>
    tpu.vector_store %arg11[%c0_19, %c0_20], %18 {strides = array<i32>} : memref<8x128xf32, #tpu.memory_space<vmem>>, vector<8x128xf32>,
    %c0_i32_21 = arith.constant 0 : i32
    %20 = arith.index_cast %c0_i32_21 : i32 to index
    %c0_22 = arith.constant 0 : index
    %c0_23 = arith.constant 0 : index
    %21 = vector.load %arg9[%20, %c0_22, %c0_23] : memref<8x8x512xf32, #tpu.memory_space<vmem>>, vector<1x8x512xf32>
    %22 = vector.shape_cast %21 : vector<1x8x512xf32> to vector<8x512xf32>
    %c0_24 = arith.constant 0 : index
    %c0_25 = arith.constant 0 : index
    %23 = vector.load %arg10[%c0_24, %c0_25] : memref<8x128xf32, #tpu.memory_space<vmem>>, vector<8x128xf32>
    %24 = arith.truncf %23 : vector<8x128xf32> to vector<8x128xbf16>
    %cst_26 = arith.constant dense<0.000000e+00> : vector<8x512xf32>
    %25 = tpu.matmul %24, %15, %cst_26 {dimension_numbers = #tpu.dot_dimension_numbers<[1], [0], [0], [1], [0, 0, 1, 1], [], []>} : vector<8x128xbf16>, vector<128x512xbf16>, vector<8x512xf32> -> vector<8x512xf32>
    %26 = arith.addf %22, %25 : vector<8x512xf32>
    %27 = vector.extract_strided_slice %26 {offsets = [0, 0], sizes = [8, 384], strides = [1, 1]} : vector<8x512xf32> to vector<8x384xf32>
    %28 = arith.negf %27 : vector<8x384xf32>
    %29 = math.exp %28 : vector<8x384xf32>
    %cst_27 = arith.constant 1.000000e+00 : f32
    %30 = vector.broadcast %cst_27 : f32 to vector<8x384xf32>
    %31 = arith.addf %30, %29 : vector<8x384xf32>
    %32 = arith.divf %30, %31 : vector<8x384xf32>
    %33 = vector.extract_strided_slice %32 {offsets = [0, 0], sizes = [8, 128], strides = [1, 1]} : vector<8x384xf32> to vector<8x128xf32>
    %34 = vector.extract_strided_slice %32 {offsets = [0, 128], sizes = [8, 128], strides = [1, 1]} : vector<8x384xf32> to vector<8x128xf32>
    %35 = vector.extract_strided_slice %32 {offsets = [0, 256], sizes = [8, 128], strides = [1, 1]} : vector<8x384xf32> to vector<8x128xf32>
    %36 = vector.extract_strided_slice %26 {offsets = [0, 384], sizes = [8, 128], strides = [1, 1]} : vector<8x512xf32> to vector<8x128xf32>
    %37 = math.tanh %36 : vector<8x128xf32>
    %c0_28 = arith.constant 0 : index
    %c0_29 = arith.constant 0 : index
    %38 = vector.load %arg11[%c0_28, %c0_29] : memref<8x128xf32, #tpu.memory_space<vmem>>, vector<8x128xf32>
    %39 = arith.mulf %34, %38 : vector<8x128xf32>
    %40 = arith.mulf %33, %37 : vector<8x128xf32>
    %41 = arith.addf %39, %40 : vector<8x128xf32>
    %42 = math.tanh %41 : vector<8x128xf32>
    %43 = arith.mulf %35, %42 : vector<8x128xf32>
    %c0_30 = arith.constant 0 : index
    %c0_31 = arith.constant 0 : index
    %44 = vector.load %arg11[%c0_30, %c0_31] : memref<8x128xf32, #tpu.memory_space<vmem>>, vector<8x128xf32>
    tpu.vector_store %arg11[%c0_30, %c0_31], %41 {strides = array<i32>} : memref<8x128xf32, #tpu.memory_space<vmem>>, vector<8x128xf32>,
    %c0_32 = arith.constant 0 : index
    %c0_33 = arith.constant 0 : index
    %45 = vector.load %arg10[%c0_32, %c0_33] : memref<8x128xf32, #tpu.memory_space<vmem>>, vector<8x128xf32>
    tpu.vector_store %arg10[%c0_32, %c0_33], %43 {strides = array<i32>} : memref<8x128xf32, #tpu.memory_space<vmem>>, vector<8x128xf32>,
    %46 = arith.index_cast %c0_i32_21 : i32 to index
    %c0_34 = arith.constant 0 : index
    %c0_35 = arith.constant 0 : index
    %47 = vector.load %arg8[%46, %c0_34, %c0_35] : memref<8x8x128xf32, #tpu.memory_space<vmem>>, vector<1x8x128xf32>
    %48 = vector.shape_cast %47 : vector<1x8x128xf32> to vector<8x128xf32>
    %49 = vector.shape_cast %43 : vector<8x128xf32> to vector<1x8x128xf32>
    tpu.vector_store %arg8[%46, %c0_34, %c0_35], %49 {strides = array<i32>} : memref<8x8x128xf32, #tpu.memory_space<vmem>>, vector<1x8x128xf32>,
    %c1_i32 = arith.constant 1 : i32
    %50 = arith.index_cast %c1_i32 : i32 to index
    %c0_36 = arith.constant 0 : index
    %c0_37 = arith.constant 0 : index
    %51 = vector.load %arg9[%50, %c0_36, %c0_37] : memref<8x8x512xf32, #tpu.memory_space<vmem>>, vector<1x8x512xf32>
    %52 = vector.shape_cast %51 : vector<1x8x512xf32> to vector<8x512xf32>
    %c0_38 = arith.constant 0 : index
    %c0_39 = arith.constant 0 : index
    %53 = vector.load %arg10[%c0_38, %c0_39] : memref<8x128xf32, #tpu.memory_space<vmem>>, vector<8x128xf32>
    %54 = arith.truncf %53 : vector<8x128xf32> to vector<8x128xbf16>
    %cst_40 = arith.constant dense<0.000000e+00> : vector<8x512xf32>
    %55 = tpu.matmul %54, %15, %cst_40 {dimension_numbers = #tpu.dot_dimension_numbers<[1], [0], [0], [1], [0, 0, 1, 1], [], []>} : vector<8x128xbf16>, vector<128x512xbf16>, vector<8x512xf32> -> vector<8x512xf32>
    %56 = arith.addf %52, %55 : vector<8x512xf32>
    %57 = vector.extract_strided_slice %56 {offsets = [0, 0], sizes = [8, 384], strides = [1, 1]} : vector<8x512xf32> to vector<8x384xf32>
    %58 = arith.negf %57 : vector<8x384xf32>
    %59 = math.exp %58 : vector<8x384xf32>
    %cst_41 = arith.constant 1.000000e+00 : f32
    %60 = vector.broadcast %cst_41 : f32 to vector<8x384xf32>
    %61 = arith.addf %60, %59 : vector<8x384xf32>
    %62 = arith.divf %60, %61 : vector<8x384xf32>
    %63 = vector.extract_strided_slice %62 {offsets = [0, 0], sizes = [8, 128], strides = [1, 1]} : vector<8x384xf32> to vector<8x128xf32>
    %64 = vector.extract_strided_slice %62 {offsets = [0, 128], sizes = [8, 128], strides = [1, 1]} : vector<8x384xf32> to vector<8x128xf32>
    %65 = vector.extract_strided_slice %62 {offsets = [0, 256], sizes = [8, 128], strides = [1, 1]} : vector<8x384xf32> to vector<8x128xf32>
    %66 = vector.extract_strided_slice %56 {offsets = [0, 384], sizes = [8, 128], strides = [1, 1]} : vector<8x512xf32> to vector<8x128xf32>
    %67 = math.tanh %66 : vector<8x128xf32>
    %c0_42 = arith.constant 0 : index
    %c0_43 = arith.constant 0 : index
    %68 = vector.load %arg11[%c0_42, %c0_43] : memref<8x128xf32, #tpu.memory_space<vmem>>, vector<8x128xf32>
    %69 = arith.mulf %64, %68 : vector<8x128xf32>
    %70 = arith.mulf %63, %67 : vector<8x128xf32>
    %71 = arith.addf %69, %70 : vector<8x128xf32>
    %72 = math.tanh %71 : vector<8x128xf32>
    %73 = arith.mulf %65, %72 : vector<8x128xf32>
    %c0_44 = arith.constant 0 : index
    %c0_45 = arith.constant 0 : index
    %74 = vector.load %arg11[%c0_44, %c0_45] : memref<8x128xf32, #tpu.memory_space<vmem>>, vector<8x128xf32>
    tpu.vector_store %arg11[%c0_44, %c0_45], %71 {strides = array<i32>} : memref<8x128xf32, #tpu.memory_space<vmem>>, vector<8x128xf32>,
    %c0_46 = arith.constant 0 : index
    %c0_47 = arith.constant 0 : index
    %75 = vector.load %arg10[%c0_46, %c0_47] : memref<8x128xf32, #tpu.memory_space<vmem>>, vector<8x128xf32>
    tpu.vector_store %arg10[%c0_46, %c0_47], %73 {strides = array<i32>} : memref<8x128xf32, #tpu.memory_space<vmem>>, vector<8x128xf32>,
    %76 = arith.index_cast %c1_i32 : i32 to index
    %c0_48 = arith.constant 0 : index
    %c0_49 = arith.constant 0 : index
    %77 = vector.load %arg8[%76, %c0_48, %c0_49] : memref<8x8x128xf32, #tpu.memory_space<vmem>>, vector<1x8x128xf32>
    %78 = vector.shape_cast %77 : vector<1x8x128xf32> to vector<8x128xf32>
    %79 = vector.shape_cast %73 : vector<8x128xf32> to vector<1x8x128xf32>
    tpu.vector_store %arg8[%76, %c0_48, %c0_49], %79 {strides = array<i32>} : memref<8x8x128xf32, #tpu.memory_space<vmem>>, vector<1x8x128xf32>,
    %c2_i32 = arith.constant 2 : i32
    %80 = arith.index_cast %c2_i32 : i32 to index
    %c0_50 = arith.constant 0 : index
    %c0_51 = arith.constant 0 : index
    %81 = vector.load %arg9[%80, %c0_50, %c0_51] : memref<8x8x512xf32, #tpu.memory_space<vmem>>, vector<1x8x512xf32>
    %82 = vector.shape_cast %81 : vector<1x8x512xf32> to vector<8x512xf32>
    %c0_52 = arith.constant 0 : index
    %c0_53 = arith.constant 0 : index
    %83 = vector.load %arg10[%c0_52, %c0_53] : memref<8x128xf32, #tpu.memory_space<vmem>>, vector<8x128xf32>
    %84 = arith.truncf %83 : vector<8x128xf32> to vector<8x128xbf16>
    %cst_54 = arith.constant dense<0.000000e+00> : vector<8x512xf32>
    %85 = tpu.matmul %84, %15, %cst_54 {dimension_numbers = #tpu.dot_dimension_numbers<[1], [0], [0], [1], [0, 0, 1, 1], [], []>} : vector<8x128xbf16>, vector<128x512xbf16>, vector<8x512xf32> -> vector<8x512xf32>
    %86 = arith.addf %82, %85 : vector<8x512xf32>
    %87 = vector.extract_strided_slice %86 {offsets = [0, 0], sizes = [8, 384], strides = [1, 1]} : vector<8x512xf32> to vector<8x384xf32>
    %88 = arith.negf %87 : vector<8x384xf32>
    %89 = math.exp %88 : vector<8x384xf32>
    %cst_55 = arith.constant 1.000000e+00 : f32
    %90 = vector.broadcast %cst_55 : f32 to vector<8x384xf32>
    %91 = arith.addf %90, %89 : vector<8x384xf32>
    %92 = arith.divf %90, %91 : vector<8x384xf32>
    %93 = vector.extract_strided_slice %92 {offsets = [0, 0], sizes = [8, 128], strides = [1, 1]} : vector<8x384xf32> to vector<8x128xf32>
    %94 = vector.extract_strided_slice %92 {offsets = [0, 128], sizes = [8, 128], strides = [1, 1]} : vector<8x384xf32> to vector<8x128xf32>
    %95 = vector.extract_strided_slice %92 {offsets = [0, 256], sizes = [8, 128], strides = [1, 1]} : vector<8x384xf32> to vector<8x128xf32>
    %96 = vector.extract_strided_slice %86 {offsets = [0, 384], sizes = [8, 128], strides = [1, 1]} : vector<8x512xf32> to vector<8x128xf32>
    %97 = math.tanh %96 : vector<8x128xf32>
    %c0_56 = arith.constant 0 : index
    %c0_57 = arith.constant 0 : index
    %98 = vector.load %arg11[%c0_56, %c0_57] : memref<8x128xf32, #tpu.memory_space<vmem>>, vector<8x128xf32>
    %99 = arith.mulf %94, %98 : vector<8x128xf32>
    %100 = arith.mulf %93, %97 : vector<8x128xf32>
    %101 = arith.addf %99, %100 : vector<8x128xf32>
    %102 = math.tanh %101 : vector<8x128xf32>
    %103 = arith.mulf %95, %102 : vector<8x128xf32>
    %c0_58 = arith.constant 0 : index
    %c0_59 = arith.constant 0 : index
    %104 = vector.load %arg11[%c0_58, %c0_59] : memref<8x128xf32, #tpu.memory_space<vmem>>, vector<8x128xf32>
    tpu.vector_store %arg11[%c0_58, %c0_59], %101 {strides = array<i32>} : memref<8x128xf32, #tpu.memory_space<vmem>>, vector<8x128xf32>,
    %c0_60 = arith.constant 0 : index
    %c0_61 = arith.constant 0 : index
    %105 = vector.load %arg10[%c0_60, %c0_61] : memref<8x128xf32, #tpu.memory_space<vmem>>, vector<8x128xf32>
    tpu.vector_store %arg10[%c0_60, %c0_61], %103 {strides = array<i32>} : memref<8x128xf32, #tpu.memory_space<vmem>>, vector<8x128xf32>,
    %106 = arith.index_cast %c2_i32 : i32 to index
    %c0_62 = arith.constant 0 : index
    %c0_63 = arith.constant 0 : index
    %107 = vector.load %arg8[%106, %c0_62, %c0_63] : memref<8x8x128xf32, #tpu.memory_space<vmem>>, vector<1x8x128xf32>
    %108 = vector.shape_cast %107 : vector<1x8x128xf32> to vector<8x128xf32>
    %109 = vector.shape_cast %103 : vector<8x128xf32> to vector<1x8x128xf32>
    tpu.vector_store %arg8[%106, %c0_62, %c0_63], %109 {strides = array<i32>} : memref<8x8x128xf32, #tpu.memory_space<vmem>>, vector<1x8x128xf32>,
    %c3_i32 = arith.constant 3 : i32
    %110 = arith.index_cast %c3_i32 : i32 to index
    %c0_64 = arith.constant 0 : index
    %c0_65 = arith.constant 0 : index
    %111 = vector.load %arg9[%110, %c0_64, %c0_65] : memref<8x8x512xf32, #tpu.memory_space<vmem>>, vector<1x8x512xf32>
    %112 = vector.shape_cast %111 : vector<1x8x512xf32> to vector<8x512xf32>
    %c0_66 = arith.constant 0 : index
    %c0_67 = arith.constant 0 : index
    %113 = vector.load %arg10[%c0_66, %c0_67] : memref<8x128xf32, #tpu.memory_space<vmem>>, vector<8x128xf32>
    %114 = arith.truncf %113 : vector<8x128xf32> to vector<8x128xbf16>
    %cst_68 = arith.constant dense<0.000000e+00> : vector<8x512xf32>
    %115 = tpu.matmul %114, %15, %cst_68 {dimension_numbers = #tpu.dot_dimension_numbers<[1], [0], [0], [1], [0, 0, 1, 1], [], []>} : vector<8x128xbf16>, vector<128x512xbf16>, vector<8x512xf32> -> vector<8x512xf32>
    %116 = arith.addf %112, %115 : vector<8x512xf32>
    %117 = vector.extract_strided_slice %116 {offsets = [0, 0], sizes = [8, 384], strides = [1, 1]} : vector<8x512xf32> to vector<8x384xf32>
    %118 = arith.negf %117 : vector<8x384xf32>
    %119 = math.exp %118 : vector<8x384xf32>
    %cst_69 = arith.constant 1.000000e+00 : f32
    %120 = vector.broadcast %cst_69 : f32 to vector<8x384xf32>
    %121 = arith.addf %120, %119 : vector<8x384xf32>
    %122 = arith.divf %120, %121 : vector<8x384xf32>
    %123 = vector.extract_strided_slice %122 {offsets = [0, 0], sizes = [8, 128], strides = [1, 1]} : vector<8x384xf32> to vector<8x128xf32>
    %124 = vector.extract_strided_slice %122 {offsets = [0, 128], sizes = [8, 128], strides = [1, 1]} : vector<8x384xf32> to vector<8x128xf32>
    %125 = vector.extract_strided_slice %122 {offsets = [0, 256], sizes = [8, 128], strides = [1, 1]} : vector<8x384xf32> to vector<8x128xf32>
    %126 = vector.extract_strided_slice %116 {offsets = [0, 384], sizes = [8, 128], strides = [1, 1]} : vector<8x512xf32> to vector<8x128xf32>
    %127 = math.tanh %126 : vector<8x128xf32>
    %c0_70 = arith.constant 0 : index
    %c0_71 = arith.constant 0 : index
    %128 = vector.load %arg11[%c0_70, %c0_71] : memref<8x128xf32, #tpu.memory_space<vmem>>, vector<8x128xf32>
    %129 = arith.mulf %124, %128 : vector<8x128xf32>
    %130 = arith.mulf %123, %127 : vector<8x128xf32>
    %131 = arith.addf %129, %130 : vector<8x128xf32>
    %132 = math.tanh %131 : vector<8x128xf32>
    %133 = arith.mulf %125, %132 : vector<8x128xf32>
    %c0_72 = arith.constant 0 : index
    %c0_73 = arith.constant 0 : index
    %134 = vector.load %arg11[%c0_72, %c0_73] : memref<8x128xf32, #tpu.memory_space<vmem>>, vector<8x128xf32>
    tpu.vector_store %arg11[%c0_72, %c0_73], %131 {strides = array<i32>} : memref<8x128xf32, #tpu.memory_space<vmem>>, vector<8x128xf32>,
    %c0_74 = arith.constant 0 : index
    %c0_75 = arith.constant 0 : index
    %135 = vector.load %arg10[%c0_74, %c0_75] : memref<8x128xf32, #tpu.memory_space<vmem>>, vector<8x128xf32>
    tpu.vector_store %arg10[%c0_74, %c0_75], %133 {strides = array<i32>} : memref<8x128xf32, #tpu.memory_space<vmem>>, vector<8x128xf32>,
    %136 = arith.index_cast %c3_i32 : i32 to index
    %c0_76 = arith.constant 0 : index
    %c0_77 = arith.constant 0 : index
    %137 = vector.load %arg8[%136, %c0_76, %c0_77] : memref<8x8x128xf32, #tpu.memory_space<vmem>>, vector<1x8x128xf32>
    %138 = vector.shape_cast %137 : vector<1x8x128xf32> to vector<8x128xf32>
    %139 = vector.shape_cast %133 : vector<8x128xf32> to vector<1x8x128xf32>
    tpu.vector_store %arg8[%136, %c0_76, %c0_77], %139 {strides = array<i32>} : memref<8x8x128xf32, #tpu.memory_space<vmem>>, vector<1x8x128xf32>,
    %c4_i32 = arith.constant 4 : i32
    %140 = arith.index_cast %c4_i32 : i32 to index
    %c0_78 = arith.constant 0 : index
    %c0_79 = arith.constant 0 : index
    %141 = vector.load %arg9[%140, %c0_78, %c0_79] : memref<8x8x512xf32, #tpu.memory_space<vmem>>, vector<1x8x512xf32>
    %142 = vector.shape_cast %141 : vector<1x8x512xf32> to vector<8x512xf32>
    %c0_80 = arith.constant 0 : index
    %c0_81 = arith.constant 0 : index
    %143 = vector.load %arg10[%c0_80, %c0_81] : memref<8x128xf32, #tpu.memory_space<vmem>>, vector<8x128xf32>
    %144 = arith.truncf %143 : vector<8x128xf32> to vector<8x128xbf16>
    %cst_82 = arith.constant dense<0.000000e+00> : vector<8x512xf32>
    %145 = tpu.matmul %144, %15, %cst_82 {dimension_numbers = #tpu.dot_dimension_numbers<[1], [0], [0], [1], [0, 0, 1, 1], [], []>} : vector<8x128xbf16>, vector<128x512xbf16>, vector<8x512xf32> -> vector<8x512xf32>
    %146 = arith.addf %142, %145 : vector<8x512xf32>
    %147 = vector.extract_strided_slice %146 {offsets = [0, 0], sizes = [8, 384], strides = [1, 1]} : vector<8x512xf32> to vector<8x384xf32>
    %148 = arith.negf %147 : vector<8x384xf32>
    %149 = math.exp %148 : vector<8x384xf32>
    %cst_83 = arith.constant 1.000000e+00 : f32
    %150 = vector.broadcast %cst_83 : f32 to vector<8x384xf32>
    %151 = arith.addf %150, %149 : vector<8x384xf32>
    %152 = arith.divf %150, %151 : vector<8x384xf32>
    %153 = vector.extract_strided_slice %152 {offsets = [0, 0], sizes = [8, 128], strides = [1, 1]} : vector<8x384xf32> to vector<8x128xf32>
    %154 = vector.extract_strided_slice %152 {offsets = [0, 128], sizes = [8, 128], strides = [1, 1]} : vector<8x384xf32> to vector<8x128xf32>
    %155 = vector.extract_strided_slice %152 {offsets = [0, 256], sizes = [8, 128], strides = [1, 1]} : vector<8x384xf32> to vector<8x128xf32>
    %156 = vector.extract_strided_slice %146 {offsets = [0, 384], sizes = [8, 128], strides = [1, 1]} : vector<8x512xf32> to vector<8x128xf32>
    %157 = math.tanh %156 : vector<8x128xf32>
    %c0_84 = arith.constant 0 : index
    %c0_85 = arith.constant 0 : index
    %158 = vector.load %arg11[%c0_84, %c0_85] : memref<8x128xf32, #tpu.memory_space<vmem>>, vector<8x128xf32>
    %159 = arith.mulf %154, %158 : vector<8x128xf32>
    %160 = arith.mulf %153, %157 : vector<8x128xf32>
    %161 = arith.addf %159, %160 : vector<8x128xf32>
    %162 = math.tanh %161 : vector<8x128xf32>
    %163 = arith.mulf %155, %162 : vector<8x128xf32>
    %c0_86 = arith.constant 0 : index
    %c0_87 = arith.constant 0 : index
    %164 = vector.load %arg11[%c0_86, %c0_87] : memref<8x128xf32, #tpu.memory_space<vmem>>, vector<8x128xf32>
    tpu.vector_store %arg11[%c0_86, %c0_87], %161 {strides = array<i32>} : memref<8x128xf32, #tpu.memory_space<vmem>>, vector<8x128xf32>,
    %c0_88 = arith.constant 0 : index
    %c0_89 = arith.constant 0 : index
    %165 = vector.load %arg10[%c0_88, %c0_89] : memref<8x128xf32, #tpu.memory_space<vmem>>, vector<8x128xf32>
    tpu.vector_store %arg10[%c0_88, %c0_89], %163 {strides = array<i32>} : memref<8x128xf32, #tpu.memory_space<vmem>>, vector<8x128xf32>,
    %166 = arith.index_cast %c4_i32 : i32 to index
    %c0_90 = arith.constant 0 : index
    %c0_91 = arith.constant 0 : index
    %167 = vector.load %arg8[%166, %c0_90, %c0_91] : memref<8x8x128xf32, #tpu.memory_space<vmem>>, vector<1x8x128xf32>
    %168 = vector.shape_cast %167 : vector<1x8x128xf32> to vector<8x128xf32>
    %169 = vector.shape_cast %163 : vector<8x128xf32> to vector<1x8x128xf32>
    tpu.vector_store %arg8[%166, %c0_90, %c0_91], %169 {strides = array<i32>} : memref<8x8x128xf32, #tpu.memory_space<vmem>>, vector<1x8x128xf32>,
    %c5_i32 = arith.constant 5 : i32
    %170 = arith.index_cast %c5_i32 : i32 to index
    %c0_92 = arith.constant 0 : index
    %c0_93 = arith.constant 0 : index
    %171 = vector.load %arg9[%170, %c0_92, %c0_93] : memref<8x8x512xf32, #tpu.memory_space<vmem>>, vector<1x8x512xf32>
    %172 = vector.shape_cast %171 : vector<1x8x512xf32> to vector<8x512xf32>
    %c0_94 = arith.constant 0 : index
    %c0_95 = arith.constant 0 : index
    %173 = vector.load %arg10[%c0_94, %c0_95] : memref<8x128xf32, #tpu.memory_space<vmem>>, vector<8x128xf32>
    %174 = arith.truncf %173 : vector<8x128xf32> to vector<8x128xbf16>
    %cst_96 = arith.constant dense<0.000000e+00> : vector<8x512xf32>
    %175 = tpu.matmul %174, %15, %cst_96 {dimension_numbers = #tpu.dot_dimension_numbers<[1], [0], [0], [1], [0, 0, 1, 1], [], []>} : vector<8x128xbf16>, vector<128x512xbf16>, vector<8x512xf32> -> vector<8x512xf32>
    %176 = arith.addf %172, %175 : vector<8x512xf32>
    %177 = vector.extract_strided_slice %176 {offsets = [0, 0], sizes = [8, 384], strides = [1, 1]} : vector<8x512xf32> to vector<8x384xf32>
    %178 = arith.negf %177 : vector<8x384xf32>
    %179 = math.exp %178 : vector<8x384xf32>
    %cst_97 = arith.constant 1.000000e+00 : f32
    %180 = vector.broadcast %cst_97 : f32 to vector<8x384xf32>
    %181 = arith.addf %180, %179 : vector<8x384xf32>
    %182 = arith.divf %180, %181 : vector<8x384xf32>
    %183 = vector.extract_strided_slice %182 {offsets = [0, 0], sizes = [8, 128], strides = [1, 1]} : vector<8x384xf32> to vector<8x128xf32>
    %184 = vector.extract_strided_slice %182 {offsets = [0, 128], sizes = [8, 128], strides = [1, 1]} : vector<8x384xf32> to vector<8x128xf32>
    %185 = vector.extract_strided_slice %182 {offsets = [0, 256], sizes = [8, 128], strides = [1, 1]} : vector<8x384xf32> to vector<8x128xf32>
    %186 = vector.extract_strided_slice %176 {offsets = [0, 384], sizes = [8, 128], strides = [1, 1]} : vector<8x512xf32> to vector<8x128xf32>
    %187 = math.tanh %186 : vector<8x128xf32>
    %c0_98 = arith.constant 0 : index
    %c0_99 = arith.constant 0 : index
    %188 = vector.load %arg11[%c0_98, %c0_99] : memref<8x128xf32, #tpu.memory_space<vmem>>, vector<8x128xf32>
    %189 = arith.mulf %184, %188 : vector<8x128xf32>
    %190 = arith.mulf %183, %187 : vector<8x128xf32>
    %191 = arith.addf %189, %190 : vector<8x128xf32>
    %192 = math.tanh %191 : vector<8x128xf32>
    %193 = arith.mulf %185, %192 : vector<8x128xf32>
    %c0_100 = arith.constant 0 : index
    %c0_101 = arith.constant 0 : index
    %194 = vector.load %arg11[%c0_100, %c0_101] : memref<8x128xf32, #tpu.memory_space<vmem>>, vector<8x128xf32>
    tpu.vector_store %arg11[%c0_100, %c0_101], %191 {strides = array<i32>} : memref<8x128xf32, #tpu.memory_space<vmem>>, vector<8x128xf32>,
    %c0_102 = arith.constant 0 : index
    %c0_103 = arith.constant 0 : index
    %195 = vector.load %arg10[%c0_102, %c0_103] : memref<8x128xf32, #tpu.memory_space<vmem>>, vector<8x128xf32>
    tpu.vector_store %arg10[%c0_102, %c0_103], %193 {strides = array<i32>} : memref<8x128xf32, #tpu.memory_space<vmem>>, vector<8x128xf32>,
    %196 = arith.index_cast %c5_i32 : i32 to index
    %c0_104 = arith.constant 0 : index
    %c0_105 = arith.constant 0 : index
    %197 = vector.load %arg8[%196, %c0_104, %c0_105] : memref<8x8x128xf32, #tpu.memory_space<vmem>>, vector<1x8x128xf32>
    %198 = vector.shape_cast %197 : vector<1x8x128xf32> to vector<8x128xf32>
    %199 = vector.shape_cast %193 : vector<8x128xf32> to vector<1x8x128xf32>
    tpu.vector_store %arg8[%196, %c0_104, %c0_105], %199 {strides = array<i32>} : memref<8x8x128xf32, #tpu.memory_space<vmem>>, vector<1x8x128xf32>,
    %c6_i32 = arith.constant 6 : i32
    %200 = arith.index_cast %c6_i32 : i32 to index
    %c0_106 = arith.constant 0 : index
    %c0_107 = arith.constant 0 : index
    %201 = vector.load %arg9[%200, %c0_106, %c0_107] : memref<8x8x512xf32, #tpu.memory_space<vmem>>, vector<1x8x512xf32>
    %202 = vector.shape_cast %201 : vector<1x8x512xf32> to vector<8x512xf32>
    %c0_108 = arith.constant 0 : index
    %c0_109 = arith.constant 0 : index
    %203 = vector.load %arg10[%c0_108, %c0_109] : memref<8x128xf32, #tpu.memory_space<vmem>>, vector<8x128xf32>
    %204 = arith.truncf %203 : vector<8x128xf32> to vector<8x128xbf16>
    %cst_110 = arith.constant dense<0.000000e+00> : vector<8x512xf32>
    %205 = tpu.matmul %204, %15, %cst_110 {dimension_numbers = #tpu.dot_dimension_numbers<[1], [0], [0], [1], [0, 0, 1, 1], [], []>} : vector<8x128xbf16>, vector<128x512xbf16>, vector<8x512xf32> -> vector<8x512xf32>
    %206 = arith.addf %202, %205 : vector<8x512xf32>
    %207 = vector.extract_strided_slice %206 {offsets = [0, 0], sizes = [8, 384], strides = [1, 1]} : vector<8x512xf32> to vector<8x384xf32>
    %208 = arith.negf %207 : vector<8x384xf32>
    %209 = math.exp %208 : vector<8x384xf32>
    %cst_111 = arith.constant 1.000000e+00 : f32
    %210 = vector.broadcast %cst_111 : f32 to vector<8x384xf32>
    %211 = arith.addf %210, %209 : vector<8x384xf32>
    %212 = arith.divf %210, %211 : vector<8x384xf32>
    %213 = vector.extract_strided_slice %212 {offsets = [0, 0], sizes = [8, 128], strides = [1, 1]} : vector<8x384xf32> to vector<8x128xf32>
    %214 = vector.extract_strided_slice %212 {offsets = [0, 128], sizes = [8, 128], strides = [1, 1]} : vector<8x384xf32> to vector<8x128xf32>
    %215 = vector.extract_strided_slice %212 {offsets = [0, 256], sizes = [8, 128], strides = [1, 1]} : vector<8x384xf32> to vector<8x128xf32>
    %216 = vector.extract_strided_slice %206 {offsets = [0, 384], sizes = [8, 128], strides = [1, 1]} : vector<8x512xf32> to vector<8x128xf32>
    %217 = math.tanh %216 : vector<8x128xf32>
    %c0_112 = arith.constant 0 : index
    %c0_113 = arith.constant 0 : index
    %218 = vector.load %arg11[%c0_112, %c0_113] : memref<8x128xf32, #tpu.memory_space<vmem>>, vector<8x128xf32>
    %219 = arith.mulf %214, %218 : vector<8x128xf32>
    %220 = arith.mulf %213, %217 : vector<8x128xf32>
    %221 = arith.addf %219, %220 : vector<8x128xf32>
    %222 = math.tanh %221 : vector<8x128xf32>
    %223 = arith.mulf %215, %222 : vector<8x128xf32>
    %c0_114 = arith.constant 0 : index
    %c0_115 = arith.constant 0 : index
    %224 = vector.load %arg11[%c0_114, %c0_115] : memref<8x128xf32, #tpu.memory_space<vmem>>, vector<8x128xf32>
    tpu.vector_store %arg11[%c0_114, %c0_115], %221 {strides = array<i32>} : memref<8x128xf32, #tpu.memory_space<vmem>>, vector<8x128xf32>,
    %c0_116 = arith.constant 0 : index
    %c0_117 = arith.constant 0 : index
    %225 = vector.load %arg10[%c0_116, %c0_117] : memref<8x128xf32, #tpu.memory_space<vmem>>, vector<8x128xf32>
    tpu.vector_store %arg10[%c0_116, %c0_117], %223 {strides = array<i32>} : memref<8x128xf32, #tpu.memory_space<vmem>>, vector<8x128xf32>,
    %226 = arith.index_cast %c6_i32 : i32 to index
    %c0_118 = arith.constant 0 : index
    %c0_119 = arith.constant 0 : index
    %227 = vector.load %arg8[%226, %c0_118, %c0_119] : memref<8x8x128xf32, #tpu.memory_space<vmem>>, vector<1x8x128xf32>
    %228 = vector.shape_cast %227 : vector<1x8x128xf32> to vector<8x128xf32>
    %229 = vector.shape_cast %223 : vector<8x128xf32> to vector<1x8x128xf32>
    tpu.vector_store %arg8[%226, %c0_118, %c0_119], %229 {strides = array<i32>} : memref<8x8x128xf32, #tpu.memory_space<vmem>>, vector<1x8x128xf32>,
    %c7_i32 = arith.constant 7 : i32
    %230 = arith.index_cast %c7_i32 : i32 to index
    %c0_120 = arith.constant 0 : index
    %c0_121 = arith.constant 0 : index
    %231 = vector.load %arg9[%230, %c0_120, %c0_121] : memref<8x8x512xf32, #tpu.memory_space<vmem>>, vector<1x8x512xf32>
    %232 = vector.shape_cast %231 : vector<1x8x512xf32> to vector<8x512xf32>
    %c0_122 = arith.constant 0 : index
    %c0_123 = arith.constant 0 : index
    %233 = vector.load %arg10[%c0_122, %c0_123] : memref<8x128xf32, #tpu.memory_space<vmem>>, vector<8x128xf32>
    %234 = arith.truncf %233 : vector<8x128xf32> to vector<8x128xbf16>
    %cst_124 = arith.constant dense<0.000000e+00> : vector<8x512xf32>
    %235 = tpu.matmul %234, %15, %cst_124 {dimension_numbers = #tpu.dot_dimension_numbers<[1], [0], [0], [1], [0, 0, 1, 1], [], []>} : vector<8x128xbf16>, vector<128x512xbf16>, vector<8x512xf32> -> vector<8x512xf32>
    %236 = arith.addf %232, %235 : vector<8x512xf32>
    %237 = vector.extract_strided_slice %236 {offsets = [0, 0], sizes = [8, 384], strides = [1, 1]} : vector<8x512xf32> to vector<8x384xf32>
    %238 = arith.negf %237 : vector<8x384xf32>
    %239 = math.exp %238 : vector<8x384xf32>
    %cst_125 = arith.constant 1.000000e+00 : f32
    %240 = vector.broadcast %cst_125 : f32 to vector<8x384xf32>
    %241 = arith.addf %240, %239 : vector<8x384xf32>
    %242 = arith.divf %240, %241 : vector<8x384xf32>
    %243 = vector.extract_strided_slice %242 {offsets = [0, 0], sizes = [8, 128], strides = [1, 1]} : vector<8x384xf32> to vector<8x128xf32>
    %244 = vector.extract_strided_slice %242 {offsets = [0, 128], sizes = [8, 128], strides = [1, 1]} : vector<8x384xf32> to vector<8x128xf32>
    %245 = vector.extract_strided_slice %242 {offsets = [0, 256], sizes = [8, 128], strides = [1, 1]} : vector<8x384xf32> to vector<8x128xf32>
    %246 = vector.extract_strided_slice %236 {offsets = [0, 384], sizes = [8, 128], strides = [1, 1]} : vector<8x512xf32> to vector<8x128xf32>
    %247 = math.tanh %246 : vector<8x128xf32>
    %c0_126 = arith.constant 0 : index
    %c0_127 = arith.constant 0 : index
    %248 = vector.load %arg11[%c0_126, %c0_127] : memref<8x128xf32, #tpu.memory_space<vmem>>, vector<8x128xf32>
    %249 = arith.mulf %244, %248 : vector<8x128xf32>
    %250 = arith.mulf %243, %247 : vector<8x128xf32>
    %251 = arith.addf %249, %250 : vector<8x128xf32>
    %252 = math.tanh %251 : vector<8x128xf32>
    %253 = arith.mulf %245, %252 : vector<8x128xf32>
    %c0_128 = arith.constant 0 : index
    %c0_129 = arith.constant 0 : index
    %254 = vector.load %arg11[%c0_128, %c0_129] : memref<8x128xf32, #tpu.memory_space<vmem>>, vector<8x128xf32>
    tpu.vector_store %arg11[%c0_128, %c0_129], %251 {strides = array<i32>} : memref<8x128xf32, #tpu.memory_space<vmem>>, vector<8x128xf32>,
    %c0_130 = arith.constant 0 : index
    %c0_131 = arith.constant 0 : index
    %255 = vector.load %arg10[%c0_130, %c0_131] : memref<8x128xf32, #tpu.memory_space<vmem>>, vector<8x128xf32>
    tpu.vector_store %arg10[%c0_130, %c0_131], %253 {strides = array<i32>} : memref<8x128xf32, #tpu.memory_space<vmem>>, vector<8x128xf32>,
    %256 = arith.index_cast %c7_i32 : i32 to index
    %c0_132 = arith.constant 0 : index
    %c0_133 = arith.constant 0 : index
    %257 = vector.load %arg8[%256, %c0_132, %c0_133] : memref<8x8x128xf32, #tpu.memory_space<vmem>>, vector<1x8x128xf32>
    %258 = vector.shape_cast %257 : vector<1x8x128xf32> to vector<8x128xf32>
    %259 = vector.shape_cast %253 : vector<8x128xf32> to vector<1x8x128xf32>
    tpu.vector_store %arg8[%256, %c0_132, %c0_133], %259 {strides = array<i32>} : memref<8x8x128xf32, #tpu.memory_space<vmem>>, vector<1x8x128xf32>,
    %c8_i32 = arith.constant 8 : i32
    %c1_i32_134 = arith.constant 1 : i32
    %260 = arith.cmpi eq, %arg0, %c1_i32_134 : i32
    %261 = arith.extui %260 : i1 to i32
    %c0_i32_135 = arith.constant 0 : i32
    %262 = arith.cmpi ne, %261, %c0_i32_135 : i32
    scf.if %262 {
      %c5 = arith.constant 5 : index
      %c0_136 = arith.constant 0 : index
      %c0_137 = arith.constant 0 : index
      %263 = vector.load %arg8[%c5, %c0_136, %c0_137] : memref<8x8x128xf32, #tpu.memory_space<vmem>>, vector<3x8x128xf32>
      %264 = vector.shape_cast %263 : vector<3x8x128xf32> to vector<24x128xf32>
      %265 = arith.truncf %264 : vector<24x128xf32> to vector<24x128xbf16>
      %c0_138 = arith.constant 0 : index
      %c0_139 = arith.constant 0 : index
      %266 = vector.load %arg5[%c0_138, %c0_139] : memref<128x128xbf16, #tpu.memory_space<vmem>>, vector<128x128xbf16>
      %cst_140 = arith.constant dense<0.000000e+00> : vector<24x128xf32>
      %267 = tpu.matmul %265, %266, %cst_140 {dimension_numbers = #tpu.dot_dimension_numbers<[1], [0], [0], [1], [0, 0, 1, 1], [], []>} : vector<24x128xbf16>, vector<128x128xbf16>, vector<24x128xf32> -> vector<24x128xf32>
      %268 = vector.shape_cast %267 : vector<24x128xf32> to vector<3x8x128xf32>
      %c0_141 = arith.constant 0 : index
      %c0_142 = arith.constant 0 : index
      %269 = vector.load %arg6[%c0_141, %c0_142] : memref<1x128xf32, #tpu.memory_space<vmem>>, vector<1x128xf32>
      %270 = vector.shape_cast %269 : vector<1x128xf32> to vector<1x1x128xf32>
      %271 = vector.broadcast %270 : vector<1x1x128xf32> to vector<3x8x128xf32>
      %272 = arith.addf %268, %271 : vector<3x8x128xf32>
      %c0_143 = arith.constant 0 : index
      %c0_144 = arith.constant 0 : index
      %c0_145 = arith.constant 0 : index
      %273 = vector.load %arg7[%c0_143, %c0_144, %c0_145] : memref<3x8x128xf32, #tpu.memory_space<vmem>>, vector<3x8x128xf32>
      tpu.vector_store %arg7[%c0_143, %c0_144, %c0_145], %272 {strides = array<i32>} : memref<3x8x128xf32, #tpu.memory_space<vmem>>, vector<3x8x128xf32>,
    } else {
    }
    return
  }
  func.func @transform_0(%arg0: i32) -> (i32, i32, i32) {
    %c0_i32 = arith.constant 0 : i32
    %c0_i32_0 = arith.constant 0 : i32
    %c0_i32_1 = arith.constant 0 : i32
    %c0_i32_2 = arith.constant 0 : i32
    return %c0_i32, %c0_i32_0, %c0_i32_1 : i32, i32, i32
  }
  func.func @transform_1(%arg0: i32) -> (i32, i32, i32) {
    %c0_i32 = arith.constant 0 : i32
    %c0_i32_0 = arith.constant 0 : i32
    %c0_i32_1 = arith.constant 0 : i32
    return %arg0, %c0_i32, %c0_i32_0 : i32, i32, i32
  }
  func.func @transform_2(%arg0: i32) -> (i32, i32, i32) {
    %c0_i32 = arith.constant 0 : i32
    %c0_i32_0 = arith.constant 0 : i32
    %c0_i32_1 = arith.constant 0 : i32
    return %arg0, %c0_i32, %c0_i32_0 : i32, i32, i32
  }
  func.func @transform_3(%arg0: i32) -> (i32, i32, i32) {
    %c0_i32 = arith.constant 0 : i32
    %c0_i32_0 = arith.constant 0 : i32
    %c0_i32_1 = arith.constant 0 : i32
    return %arg0, %c0_i32, %c0_i32_0 : i32, i32, i32
  }
  func.func @transform_4(%arg0: i32) -> (i32, i32) {
    %c0_i32 = arith.constant 0 : i32
    %c0_i32_0 = arith.constant 0 : i32
    %c0_i32_1 = arith.constant 0 : i32
    return %c0_i32, %c0_i32_0 : i32, i32
  }
  func.func @transform_5(%arg0: i32) -> (i32, i32) {
    %c0_i32 = arith.constant 0 : i32
    %c0_i32_0 = arith.constant 0 : i32
    %c0_i32_1 = arith.constant 0 : i32
    return %c0_i32, %c0_i32_0 : i32, i32
  }
  func.func @transform_6(%arg0: i32) -> (i32, i32, i32) {
    %c0_i32 = arith.constant 0 : i32
    %c0_i32_0 = arith.constant 0 : i32
    %c0_i32_1 = arith.constant 0 : i32
    %c0_i32_2 = arith.constant 0 : i32
    return %c0_i32, %c0_i32_0, %c0_i32_1 : i32, i32, i32
  }
}

</mosaic_0001>

<llo_original>
// kernel: tpu_custom_call.1
$region0: #{tpu_custom_call.1}
  #allocation0 [shape = 'u32[]', space=smem, size = 0x4, offset = 0x4, fixed_abs, tag = 'smem constant byte address 0x4 - core index']
  #allocation1 [shape = 'u32[144,128]{1,0:T(1,128)}', space=vmem, size = 0x12000, scoped, tag = 'internal scratch']
  #allocation2 [shape = 'f32[8,8,128]{2,1,0:T(8,128)}', space=vmem, size = 0x8000, scoped, tag = 'scratch operand']
  #allocation3 [shape = 'f32[8,8,512]{2,1,0:T(8,128)}', space=vmem, size = 0x20000, scoped, tag = 'scratch operand']
  #allocation4 [shape = 'f32[8,128]{1,0:T(8,128)}', space=vmem, size = 0x1000, scoped, tag = 'scratch operand']
  #allocation5 [shape = 'f32[8,128]{1,0:T(8,128)}', space=vmem, size = 0x1000, scoped, tag = 'scratch operand']
  %s0 = inlined_call_operand.hbm [shape: f32[8,8,128], index: 0, kind: input, shape index: {}]
  %s1 = inlined_call_operand.hbm [shape: bf16[2,128,512], index: 1, kind: input, shape index: {}]
  %s2 = inlined_call_operand.hbm [shape: bf16[2,128,512], index: 2, kind: input, shape index: {}]
  %s3 = inlined_call_operand.hbm [shape: f32[2,1,512], index: 3, kind: input, shape index: {}]
  %s4 = inlined_call_operand.hbm [shape: bf16[128,128], index: 4, kind: input, shape index: {}]
  %s5 = inlined_call_operand.vmem [shape: f32[1,128], index: 5, kind: input, shape index: {}]
  %s6 = inlined_call_operand.hbm [shape: f32[3,8,128], index: 6, kind: output, shape index: {}]
  %s7 = sld [smem:[#allocation0]]
  $region85: #{tpu_custom_call.1} parent=0
    _
  %s9 = ssub.s32 1, %s7
  %s10 = scalar_select 0, %s9, %s7
  $region1: #{tpu_custom_call.1} parent=0
    #allocation6 [shape = 'u8[32768]{0}', space=vmem, size = 0x8000, scoped, tag = 'input window, operand 0, single buffered']
    #allocation7 [shape = 's32[2]{0}', space=sflag, size = 0x8, scoped, tag = 'scoped memory for tpu_custom_call.1']
    #allocation8 [shape = 's32[2]{0}', space=sflag, size = 0x8, scoped, tag = 'scoped memory for tpu_custom_call.1']
    #allocation9 [shape = 'u8[262144]{0}', space=vmem, size = 0x40000, scoped, tag = 'input window, operand 1']
    #allocation10 [shape = 's32[2]{0}', space=sflag, size = 0x8, scoped, tag = 'scoped memory for tpu_custom_call.1']
    #allocation11 [shape = 'u8[262144]{0}', space=vmem, size = 0x40000, scoped, tag = 'input window, operand 2']
    #allocation12 [shape = 'u8[4096]{0}', space=vmem, size = 0x1000, scoped, tag = 'input window, operand 3']
    #allocation13 [shape = 's32[2]{0}', space=sflag, size = 0x8, scoped, tag = 'scoped memory for tpu_custom_call.1']
    #allocation14 [shape = 'u8[32768]{0}', space=vmem, size = 0x8000, scoped, tag = 'input window, operand 4, single buffered']
    #allocation15 [shape = 'u8[12288]{0}', space=vmem, size = 0x3000, scoped, tag = 'output window, operand 0, single buffered']
    %11 = vsyncpa [#allocation7], 0
    %12 = vsyncpa [#allocation10], 0
    %s13 = scalar_lea.sflag [#allocation10], 1
    %14 = vsyncpa %s13, 0
    %15 = vsyncpa [#allocation13], 0
    %s16 = scalar_lea.sflag [#allocation13], 1
    %17 = vsyncpa %s16, 0
    %18 = vsyncpa [#allocation8], 0
    loop: start=0, step=1, limit=4
    $region2: #{tpu_custom_call.1} parent=1 // loop_pre_header
      _
    $region3: #{tpu_custom_call.1} parent=1 // loop_header
      %s20 = sphi 0, %s24
      %p21 = scmp.ge.s32.totalorder %s20, 4
      %s28 = sphi 0, %s28
      %s30 = sphi 0, %s28
      %s31 = sphi 0, %s30
      %s45 = sphi 0, %s31
      %s51 = sphi 0, %s53
      %s54 = sphi 0, %s51
      %s55 = sphi 0, %s54
      %s71 = sphi 0, %s55
      %s77 = sphi 0, %s79
      %s80 = sphi 0, %s77
      %s81 = sphi 0, %s80
      %s97 = sphi 0, %s81
      %s103 = sphi 0, %s105
      %s106 = sphi 0, %s103
      %s107 = sphi 0, %s106
      %s123 = sphi 0, %s107
      %s127 = sphi 0, %s127
      %s129 = sphi 0, %s127
      %s130 = sphi 0, %s129
      %s144 = sphi 0, %s130
      %s148 = sphi 0, %s148
      %s150 = sphi 0, %s148
      %s151 = sphi 0, %s150
      %s165 = sphi 0, %s151
      %s169 = sphi 0, %s169
      %s171 = sphi 0, %s169
      %s172 = sphi 0, %s171
      %s186 = sphi 0, %s172
    $region4: #{tpu_custom_call.1} parent=1 // loop_header_branch
      %23 = sbr.rel (%p21) target = $region8
    $region5: #{tpu_custom_call.1} parent=1 // loop_body
      %s25 = ssub.s32 %s20, 1
      %s26 = ssub.s32 %s20, 2
      %s27 = sadd.s32 %s20, 1
      %s29 = sadd.s32 %s28, 1
      %p32 = scmp.eq.s32.totalorder %s20, 1
      %p33 = scmp.ne.s32.totalorder %s28, %s30
      %p34 = scmp.eq.s32.totalorder %s20, 0
      %p35 = por %p33, %p34
      %p36 = scmp.ne.s32.totalorder %s28, %s30
      %p37 = scmp.eq.s32.totalorder %s25, 1
      %p38 = por %p36, %p37
      %p39 = scmp.ne.s32.totalorder %s30, %s31
      %p40 = scmp.eq.s32.totalorder %s25, 0
      %p41 = por %p39, %p40
      %p42 = scmp.ne.s32.totalorder %s30, %s31
      %p43 = scmp.eq.s32.totalorder %s26, 1
      %p44 = por %p42, %p43
      %p46 = scmp.ne.s32.totalorder %s31, %s45
      %p47 = scmp.eq.s32.totalorder %s26, 0
      %p48 = por %p46, %p47
      %s49 = ssub.s32 %s20, %s27
      %p50 = scmp.eq.s32.totalorder %s49, 0
      %s52 = sadd.s32 %s51, 1
      %s53 = scalar_select %p50, %s51, %s52
      %p56 = pneg %p50
      %p57 = scmp.eq.s32.totalorder %s20, 1
      %p58 = por %p56, %p57
      %p59 = scmp.ne.s32.totalorder %s51, %s54
      %p60 = scmp.eq.s32.totalorder %s20, 0
      %p61 = por %p59, %p60
      %p62 = scmp.ne.s32.totalorder %s51, %s54
      %p63 = scmp.eq.s32.totalorder %s25, 1
      %p64 = por %p62, %p63
      %p65 = scmp.ne.s32.totalorder %s54, %s55
      %p66 = scmp.eq.s32.totalorder %s25, 0
      %p67 = por %p65, %p66
      %p68 = scmp.ne.s32.totalorder %s54, %s55
      %p69 = scmp.eq.s32.totalorder %s26, 1
      %p70 = por %p68, %p69
      %p72 = scmp.ne.s32.totalorder %s55, %s71
      %p73 = scmp.eq.s32.totalorder %s26, 0
      %p74 = por %p72, %p73
      %s75 = ssub.s32 %s20, %s27
      %p76 = scmp.eq.s32.totalorder %s75, 0
      %s78 = sadd.s32 %s77, 1
      %s79 = scalar_select %p76, %s77, %s78
      %p82 = pneg %p76
      %p83 = scmp.eq.s32.totalorder %s20, 1
      %p84 = por %p82, %p83
      %p85 = scmp.ne.s32.totalorder %s77, %s80
      %p86 = scmp.eq.s32.totalorder %s20, 0
      %p87 = por %p85, %p86
      %p88 = scmp.ne.s32.totalorder %s77, %s80
      %p89 = scmp.eq.s32.totalorder %s25, 1
      %p90 = por %p88, %p89
      %p91 = scmp.ne.s32.totalorder %s80, %s81
      %p92 = scmp.eq.s32.totalorder %s25, 0
      %p93 = por %p91, %p92
      %p94 = scmp.ne.s32.totalorder %s80, %s81
      %p95 = scmp.eq.s32.totalorder %s26, 1
      %p96 = por %p94, %p95
      %p98 = scmp.ne.s32.totalorder %s81, %s97
      %p99 = scmp.eq.s32.totalorder %s26, 0
      %p100 = por %p98, %p99
      %s101 = ssub.s32 %s20, %s27
      %p102 = scmp.eq.s32.totalorder %s101, 0
      %s104 = sadd.s32 %s103, 1
      %s105 = scalar_select %p102, %s103, %s104
      %p108 = pneg %p102
      %p109 = scmp.eq.s32.totalorder %s20, 1
      %p110 = por %p108, %p109
      %p111 = scmp.ne.s32.totalorder %s103, %s106
      %p112 = scmp.eq.s32.totalorder %s20, 0
      %p113 = por %p111, %p112
      %p114 = scmp.ne.s32.totalorder %s103, %s106
      %p115 = scmp.eq.s32.totalorder %s25, 1
      %p116 = por %p114, %p115
      %p117 = scmp.ne.s32.totalorder %s106, %s107
      %p118 = scmp.eq.s32.totalorder %s25, 0
      %p119 = por %p117, %p118
      %p120 = scmp.ne.s32.totalorder %s106, %s107
      %p121 = scmp.eq.s32.totalorder %s26, 1
      %p122 = por %p120, %p121
      %p124 = scmp.ne.s32.totalorder %s107, %s123
      %p125 = scmp.eq.s32.totalorder %s26, 0
      %p126 = por %p124, %p125
      %s128 = sadd.s32 %s127, 1
      %p131 = scmp.eq.s32.totalorder %s20, 1
      %p132 = scmp.ne.s32.totalorder %s127, %s129
      %p133 = scmp.eq.s32.totalorder %s20, 0
      %p134 = por %p132, %p133
      %p135 = scmp.ne.s32.totalorder %s127, %s129
      %p136 = scmp.eq.s32.totalorder %s25, 1
      %p137 = por %p135, %p136
      %p138 = scmp.ne.s32.totalorder %s129, %s130
      %p139 = scmp.eq.s32.totalorder %s25, 0
      %p140 = por %p138, %p139
      %p141 = scmp.ne.s32.totalorder %s129, %s130
      %p142 = scmp.eq.s32.totalorder %s26, 1
      %p143 = por %p141, %p142
      %p145 = scmp.ne.s32.totalorder %s130, %s144
      %p146 = scmp.eq.s32.totalorder %s26, 0
      %p147 = por %p145, %p146
      %s149 = sadd.s32 %s148, 1
      %p152 = scmp.eq.s32.totalorder %s20, 1
      %p153 = scmp.ne.s32.totalorder %s148, %s150
      %p154 = scmp.eq.s32.totalorder %s20, 0
      %p155 = por %p153, %p154
      %p156 = scmp.ne.s32.totalorder %s148, %s150
      %p157 = scmp.eq.s32.totalorder %s25, 1
      %p158 = por %p156, %p157
      %p159 = scmp.ne.s32.totalorder %s150, %s151
      %p160 = scmp.eq.s32.totalorder %s25, 0
      %p161 = por %p159, %p160
      %p162 = scmp.ne.s32.totalorder %s150, %s151
      %p163 = scmp.eq.s32.totalorder %s26, 1
      %p164 = por %p162, %p163
      %p166 = scmp.ne.s32.totalorder %s151, %s165
      %p167 = scmp.eq.s32.totalorder %s26, 0
      %p168 = por %p166, %p167
      %s170 = sadd.s32 %s169, 1
      %p173 = scmp.eq.s32.totalorder %s20, 1
      %p174 = scmp.ne.s32.totalorder %s169, %s171
      %p175 = scmp.eq.s32.totalorder %s20, 0
      %p176 = por %p174, %p175
      %p177 = scmp.ne.s32.totalorder %s169, %s171
      %p178 = scmp.eq.s32.totalorder %s25, 1
      %p179 = por %p177, %p178
      %p180 = scmp.ne.s32.totalorder %s171, %s172
      %p181 = scmp.eq.s32.totalorder %s25, 0
      %p182 = por %p180, %p181
      %p183 = scmp.ne.s32.totalorder %s171, %s172
      %p184 = scmp.eq.s32.totalorder %s26, 1
      %p185 = por %p183, %p184
      %p187 = scmp.ne.s32.totalorder %s172, %s186
      %p188 = scmp.eq.s32.totalorder %s26, 0
      %p189 = por %p187, %p188
      %p190 = scmp.le.s32.totalorder 1, %s20
      %p191 = scmp.lt.s32.totalorder %s20, 3
      %p192 = pnand %p190, %p191
      %p193 = pneg %p192
      // Predicated region
      $region9: #{tpu_custom_call.1} parent=5 // pred_check
        _
      $region10: #{tpu_custom_call.1} parent=5 // pred_check_branch
        %195 = sbr.rel (%p192) target = $region12
      $region11: #{tpu_custom_call.1} parent=5 // pred_region
        %s196 = ssub.s32 %s20, 1
        // Predicated region
        $region13: #{tpu_custom_call.1} parent=11 // pred_check
          %p197 = pneg %p41
        $region14: #{tpu_custom_call.1} parent=11 // pred_check_branch
          %199 = sbr.rel (%p197) target = $region16
        $region15: #{tpu_custom_call.1} parent=11 // pred_region
          %s201 = ssub.s32 1024, 1024
          %202 = vsyncadd [#allocation7], %s201
          %s203 = sshll.u32 [#allocation6], 4
          %s204 = int_to_ptr.vmem [resolvable:$true] %s203
          %209 = dma.hbm_to_vmem [thread:$0]  %s0, 1024, %s204, [#allocation7], 128, 128, 8
        $region16: #{tpu_custom_call.1} parent=11 // pred_fallthru
          _
        // Predicated region
        $region17: #{tpu_custom_call.1} parent=11 // pred_check
          %p210 = pneg %p140
        $region18: #{tpu_custom_call.1} parent=11 // pred_check_branch
          %212 = sbr.rel (%p210) target = $region20
        $region19: #{tpu_custom_call.1} parent=11 // pred_region
          %s214 = ssub.s32 1024, 1024
          %215 = vsyncadd [#allocation13], %s214
          %s216 = sshll.u32 [#allocation14], 4
          %s217 = int_to_ptr.vmem [resolvable:$true] %s216
          %222 = dma.hbm_to_vmem [thread:$0]  %s4, 1024, %s217, [#allocation13], 64, 64, 4
        $region20: #{tpu_custom_call.1} parent=11 // pred_fallthru
          _
        // Predicated region
        $region21: #{tpu_custom_call.1} parent=11 // pred_check
          %p223 = pneg %p161
        $region22: #{tpu_custom_call.1} parent=11 // pred_check_branch
          %225 = sbr.rel (%p223) target = $region24
        $region23: #{tpu_custom_call.1} parent=11 // pred_region
          _
        $region24: #{tpu_custom_call.1} parent=11 // pred_fallthru
          _
      $region12: #{tpu_custom_call.1} parent=5 // pred_fallthru
        _
      %p226 = scmp.lt.s32.totalorder %s20, 2
      // Predicated region
      $region25: #{tpu_custom_call.1} parent=5 // pred_check
        %p227 = pneg %p226
      $region26: #{tpu_custom_call.1} parent=5 // pred_check_branch
        %229 = sbr.rel (%p227) target = $region28
      $region27: #{tpu_custom_call.1} parent=5 // pred_region
        // Predicated region
        $region29: #{tpu_custom_call.1} parent=27 // pred_check
          %p230 = pneg %p61
        $region30: #{tpu_custom_call.1} parent=27 // pred_check_branch
          %232 = sbr.rel (%p230) target = $region32
        $region31: #{tpu_custom_call.1} parent=27 // pred_region
          %s233 = sand.u32 %s20, 1
          %s234 = scalar_lea.sflag [#allocation10], %s233
          %s235 = sand.u32 %s51, 1
          %s236 = smul.addr %s235, 256
          %s237 = scalar_lea.vmem [#allocation9], %s236
          %s239 = ssub.s32 4096, 4096
          %240 = vsyncadd %s234, %s239
          %s241 = smul.addr %s20, 64
          %s242 = smul.addr %s241, 64
          %s243 = scalar_lea.hbm %s1, %s242
          %s244 = sshll.u32 %s237, 4
          %s245 = int_to_ptr.vmem [resolvable:$true] %s244
          %250 = dma.hbm_to_vmem [thread:$0]  %s243, 4096, %s245, %s234, 256, 256, 16
        $region32: #{tpu_custom_call.1} parent=27 // pred_fallthru
          _
        // Predicated region
        $region33: #{tpu_custom_call.1} parent=27 // pred_check
          %p251 = pneg %p87
        $region34: #{tpu_custom_call.1} parent=27 // pred_check_branch
          %253 = sbr.rel (%p251) target = $region36
        $region35: #{tpu_custom_call.1} parent=27 // pred_region
          %s254 = sand.u32 %s20, 1
          %s255 = scalar_lea.sflag [#allocation10], %s254
          %s256 = sand.u32 %s77, 1
          %s257 = smul.addr %s256, 256
          %s258 = scalar_lea.vmem [#allocation11], %s257
          %s260 = ssub.s32 4096, 4096
          %261 = vsyncadd %s255, %s260
          %s262 = smul.addr %s20, 64
          %s263 = smul.addr %s262, 64
          %s264 = scalar_lea.hbm %s2, %s263
          %s265 = sshll.u32 %s258, 4
          %s266 = int_to_ptr.vmem [resolvable:$true] %s265
          %271 = dma.hbm_to_vmem [thread:$0]  %s264, 4096, %s266, %s255, 256, 256, 16
        $region36: #{tpu_custom_call.1} parent=27 // pred_fallthru
          _
        // Predicated region
        $region37: #{tpu_custom_call.1} parent=27 // pred_check
          %p272 = pneg %p113
        $region38: #{tpu_custom_call.1} parent=27 // pred_check_branch
          %274 = sbr.rel (%p272) target = $region40
        $region39: #{tpu_custom_call.1} parent=27 // pred_region
          %s275 = sand.u32 %s20, 1
          %s276 = scalar_lea.sflag [#allocation13], %s275
          %s277 = sand.u32 %s103, 1
          %s278 = smul.addr %s277, 4
          %s279 = scalar_lea.vmem [#allocation12], %s278
          %s281 = ssub.s32 64, 64
          %282 = vsyncadd %s276, %s281
          %s283 = smul.addr %s20, 4
          %s284 = smul.addr %s283, 16
          %s285 = scalar_lea.hbm %s3, %s284
          %s287 = sshll.u32 %s279, 4
          %s288 = int_to_ptr.vmem [resolvable:$true] %s287
          %290 = dma.hbm_to_vmem [thread:$0]  %s285, 64, %s288, %s276
        $region40: #{tpu_custom_call.1} parent=27 // pred_fallthru
          _
      $region28: #{tpu_custom_call.1} parent=5 // pred_fallthru
        _
      %p291 = scmp.le.s32.totalorder 1, %s20
      %p292 = scmp.lt.s32.totalorder %s20, 3
      %p293 = pnand %p291, %p292
      %p294 = pneg %p293
      // Predicated region
      $region41: #{tpu_custom_call.1} parent=5 // pred_check
        _
      $region42: #{tpu_custom_call.1} parent=5 // pred_check_branch
        %296 = sbr.rel (%p293) target = $region44
      $region43: #{tpu_custom_call.1} parent=5 // pred_region
        %s297 = ssub.s32 %s20, 1
        // Predicated region
        $region45: #{tpu_custom_call.1} parent=43 // pred_check
          %p298 = pneg %p41
        $region46: #{tpu_custom_call.1} parent=43 // pred_check_branch
          %300 = sbr.rel (%p298) target = $region48
        $region47: #{tpu_custom_call.1} parent=43 // pred_region
          %301 = dma.done [#allocation7], 1024
        $region48: #{tpu_custom_call.1} parent=43 // pred_fallthru
          _
        %s302 = sand.u32 %s25, 1
        %s303 = scalar_lea.sflag [#allocation10], %s302
        %s304 = sand.u32 %s54, 1
        %s305 = smul.addr %s304, 256
        %s306 = scalar_lea.vmem [#allocation9], %s305
        // Predicated region
        $region49: #{tpu_custom_call.1} parent=43 // pred_check
          %p307 = pneg %p67
        $region50: #{tpu_custom_call.1} parent=43 // pred_check_branch
          %309 = sbr.rel (%p307) target = $region52
        $region51: #{tpu_custom_call.1} parent=43 // pred_region
          %310 = dma.done %s303, 4096
        $region52: #{tpu_custom_call.1} parent=43 // pred_fallthru
          _
        %s311 = sand.u32 %s25, 1
        %s312 = scalar_lea.sflag [#allocation10], %s311
        %s313 = sand.u32 %s80, 1
        %s314 = smul.addr %s313, 256
        %s315 = scalar_lea.vmem [#allocation11], %s314
        // Predicated region
        $region53: #{tpu_custom_call.1} parent=43 // pred_check
          %p316 = pneg %p93
        $region54: #{tpu_custom_call.1} parent=43 // pred_check_branch
          %318 = sbr.rel (%p316) target = $region56
        $region55: #{tpu_custom_call.1} parent=43 // pred_region
          %319 = dma.done %s312, 4096
        $region56: #{tpu_custom_call.1} parent=43 // pred_fallthru
          _
        %s320 = sand.u32 %s25, 1
        %s321 = scalar_lea.sflag [#allocation13], %s320
        %s322 = sand.u32 %s106, 1
        %s323 = smul.addr %s322, 4
        %s324 = scalar_lea.vmem [#allocation12], %s323
        // Predicated region
        $region57: #{tpu_custom_call.1} parent=43 // pred_check
          %p325 = pneg %p119
        $region58: #{tpu_custom_call.1} parent=43 // pred_check_branch
          %327 = sbr.rel (%p325) target = $region60
        $region59: #{tpu_custom_call.1} parent=43 // pred_region
          %328 = dma.done %s321, 64
        $region60: #{tpu_custom_call.1} parent=43 // pred_fallthru
          _
        // Predicated region
        $region61: #{tpu_custom_call.1} parent=43 // pred_check
          %p329 = pneg %p140
        $region62: #{tpu_custom_call.1} parent=43 // pred_check_branch
          %331 = sbr.rel (%p329) target = $region64
        $region63: #{tpu_custom_call.1} parent=43 // pred_region
          %332 = dma.done [#allocation13], 1024
        $region64: #{tpu_custom_call.1} parent=43 // pred_fallthru
          _
        %p333 = pneg %p41
        %p334 = pneg %p38
        %s335 = sand.u32 %s25, 1
        %s336 = scalar_lea.sflag [#allocation10], %s335
        %s337 = sand.u32 %s54, 1
        %s338 = smul.addr %s337, 256
        %s339 = scalar_lea.vmem [#allocation9], %s338
        %p340 = pneg %p67
        %p341 = pneg %p64
        %s342 = sand.u32 %s25, 1
        %s343 = scalar_lea.sflag [#allocation10], %s342
        %s344 = sand.u32 %s80, 1
        %s345 = smul.addr %s344, 256
        %s346 = scalar_lea.vmem [#allocation11], %s345
        %p347 = pneg %p93
        %p348 = pneg %p90
        %s349 = sand.u32 %s25, 1
        %s350 = scalar_lea.sflag [#allocation13], %s349
        %s351 = sand.u32 %s106, 1
        %s352 = smul.addr %s351, 4
        %s353 = scalar_lea.vmem [#allocation12], %s352
        %p354 = pneg %p119
        %p355 = pneg %p116
        %p356 = pneg %p140
        %p357 = pneg %p137
        %p358 = pneg %p161
        %p359 = pneg %p158
        %p360 = pneg %p182
        %p361 = pneg %p179
        %p363 = scmp.eq.s32.totalorder %s25, 0
        // Predicated region
        $region65: #{tpu_custom_call.1} parent=43 // pred_check
          %p364 = pneg %p363
        $region66: #{tpu_custom_call.1} parent=43 // pred_check_branch
          %366 = sbr.rel (%p364) target = $region68
        $region67: #{tpu_custom_call.1} parent=43 // pred_region
          %v367 = vld [vmem:[#allocation6] sm:$0xff]
          %v368 = vld [vmem:[#allocation6 + $0x8] sm:$0xff]
          %v369 = vld [vmem:[#allocation6 + $0x10] sm:$0xff]
          %v370 = vld [vmem:[#allocation6 + $0x18] sm:$0xff]
          %v371 = vld [vmem:[#allocation6 + $0x20] sm:$0xff]
          %v372 = vld [vmem:[#allocation6 + $0x28] sm:$0xff]
          %v373 = vld [vmem:[#allocation6 + $0x30] sm:$0xff]
          %v374 = vld [vmem:[#allocation6 + $0x38] sm:$0xff]
          %375 = vst [vmem:[#allocation2] sm:$0xff] %v367
          %376 = vst [vmem:[#allocation2 + $0x8] sm:$0xff] %v368
          %377 = vst [vmem:[#allocation2 + $0x10] sm:$0xff] %v369
          %378 = vst [vmem:[#allocation2 + $0x18] sm:$0xff] %v370
          %379 = vst [vmem:[#allocation2 + $0x20] sm:$0xff] %v371
          %380 = vst [vmem:[#allocation2 + $0x28] sm:$0xff] %v372
          %381 = vst [vmem:[#allocation2 + $0x30] sm:$0xff] %v373
          %382 = vst [vmem:[#allocation2 + $0x38] sm:$0xff] %v374
        $region68: #{tpu_custom_call.1} parent=43 // pred_fallthru
          _
        %v383 = vld [vmem:[%s306] sm:$0xff]
        %v384 = vld [vmem:[%s306 + $0x8] sm:$0xff]
        %v385 = vld [vmem:[%s306 + $0x10] sm:$0xff]
        %v386 = vld [vmem:[%s306 + $0x18] sm:$0xff]
        %v387 = vld [vmem:[%s306 + $0x20] sm:$0xff]
        %v388 = vld [vmem:[%s306 + $0x28] sm:$0xff]
        %v389 = vld [vmem:[%s306 + $0x30] sm:$0xff]
        %v390 = vld [vmem:[%s306 + $0x38] sm:$0xff]
        %v391 = vld [vmem:[%s306 + $0x40] sm:$0xff]
        %v392 = vld [vmem:[%s306 + $0x48] sm:$0xff]
        %v393 = vld [vmem:[%s306 + $0x50] sm:$0xff]
        %v394 = vld [vmem:[%s306 + $0x58] sm:$0xff]
        %v395 = vld [vmem:[%s306 + $0x60] sm:$0xff]
        %v396 = vld [vmem:[%s306 + $0x68] sm:$0xff]
        %v397 = vld [vmem:[%s306 + $0x70] sm:$0xff]
        %v398 = vld [vmem:[%s306 + $0x78] sm:$0xff]
        %v399 = vld [vmem:[%s306 + $0x80] sm:$0xff]
        %v400 = vld [vmem:[%s306 + $0x88] sm:$0xff]
        %v401 = vld [vmem:[%s306 + $0x90] sm:$0xff]
        %v402 = vld [vmem:[%s306 + $0x98] sm:$0xff]
        %v403 = vld [vmem:[%s306 + $0xa0] sm:$0xff]
        %v404 = vld [vmem:[%s306 + $0xa8] sm:$0xff]
        %v405 = vld [vmem:[%s306 + $0xb0] sm:$0xff]
        %v406 = vld [vmem:[%s306 + $0xb8] sm:$0xff]
        %v407 = vld [vmem:[%s306 + $0xc0] sm:$0xff]
        %v408 = vld [vmem:[%s306 + $0xc8] sm:$0xff]
        %v409 = vld [vmem:[%s306 + $0xd0] sm:$0xff]
        %v410 = vld [vmem:[%s306 + $0xd8] sm:$0xff]
        %v411 = vld [vmem:[%s306 + $0xe0] sm:$0xff]
        %v412 = vld [vmem:[%s306 + $0xe8] sm:$0xff]
        %v413 = vld [vmem:[%s306 + $0xf0] sm:$0xff]
        %v414 = vld [vmem:[%s306 + $0xf8] sm:$0xff]
        %v415 = vld [vmem:[#allocation2] sm:$0xff]
        %v416 = vld [vmem:[#allocation2 + $0x8] sm:$0xff]
        %v417 = vld [vmem:[#allocation2 + $0x10] sm:$0xff]
        %v418 = vld [vmem:[#allocation2 + $0x18] sm:$0xff]
        %v419 = vld [vmem:[#allocation2 + $0x20] sm:$0xff]
        %v420 = vld [vmem:[#allocation2 + $0x28] sm:$0xff]
        %v421 = vld [vmem:[#allocation2 + $0x30] sm:$0xff]
        %v422 = vld [vmem:[#allocation2 + $0x38] sm:$0xff]
        %v423 = vpack.c.bf16 %v416, %v415
        %v424 = vpack.c.bf16 %v418, %v417
        %v425 = vpack.c.bf16 %v420, %v419
        %v426 = vpack.c.bf16 %v422, %v421
        %v459 = vunpack.c.l.b16 %v383
        %v460 = vunpack.c.h.b16 %v383
        %v461 = vunpack.c.l.b16 %v384
        %v462 = vunpack.c.h.b16 %v384
        %v463 = vunpack.c.l.b16 %v385
        %v464 = vunpack.c.h.b16 %v385
        %v465 = vunpack.c.l.b16 %v386
        %v466 = vunpack.c.h.b16 %v386
        %v467 = vunpack.c.l.b16 %v387
        %v468 = vunpack.c.h.b16 %v387
        %v469 = vunpack.c.l.b16 %v388
        %v470 = vunpack.c.h.b16 %v388
        %v471 = vunpack.c.l.b16 %v389
        %v472 = vunpack.c.h.b16 %v389
        %v473 = vunpack.c.l.b16 %v390
        %v474 = vunpack.c.h.b16 %v390
        %v475 = vunpack.c.l.b16 %v391
        %v476 = vunpack.c.h.b16 %v391
        %v477 = vunpack.c.l.b16 %v392
        %v478 = vunpack.c.h.b16 %v392
        %v479 = vunpack.c.l.b16 %v393
        %v480 = vunpack.c.h.b16 %v393
        %v481 = vunpack.c.l.b16 %v394
        %v482 = vunpack.c.h.b16 %v394
        %v483 = vunpack.c.l.b16 %v395
        %v484 = vunpack.c.h.b16 %v395
        %v485 = vunpack.c.l.b16 %v396
        %v486 = vunpack.c.h.b16 %v396
        %v487 = vunpack.c.l.b16 %v397
        %v488 = vunpack.c.h.b16 %v397
        %v489 = vunpack.c.l.b16 %v398
        %v490 = vunpack.c.h.b16 %v398
        %v491 = vunpack.c.l.b16 %v399
        %v492 = vunpack.c.h.b16 %v399
        %v493 = vunpack.c.l.b16 %v400
        %v494 = vunpack.c.h.b16 %v400
        %v495 = vunpack.c.l.b16 %v401
        %v496 = vunpack.c.h.b16 %v401
        %v497 = vunpack.c.l.b16 %v402
        %v498 = vunpack.c.h.b16 %v402
        %v499 = vunpack.c.l.b16 %v403
        %v500 = vunpack.c.h.b16 %v403
        %v501 = vunpack.c.l.b16 %v404
        %v502 = vunpack.c.h.b16 %v404
        %v503 = vunpack.c.l.b16 %v405
        %v504 = vunpack.c.h.b16 %v405
        %v505 = vunpack.c.l.b16 %v406
        %v506 = vunpack.c.h.b16 %v406
        %v507 = vunpack.c.l.b16 %v407
        %v508 = vunpack.c.h.b16 %v407
        %v509 = vunpack.c.l.b16 %v408
        %v510 = vunpack.c.h.b16 %v408
        %v511 = vunpack.c.l.b16 %v409
        %v512 = vunpack.c.h.b16 %v409
        %v513 = vunpack.c.l.b16 %v410
        %v514 = vunpack.c.h.b16 %v410
        %v515 = vunpack.c.l.b16 %v411
        %v516 = vunpack.c.h.b16 %v411
        %v517 = vunpack.c.l.b16 %v412
        %v518 = vunpack.c.h.b16 %v412
        %v519 = vunpack.c.l.b16 %v413
        %v520 = vunpack.c.h.b16 %v413
        %v521 = vunpack.c.l.b16 %v414
        %v522 = vunpack.c.h.b16 %v414
        %v523 = vpack.c.b16 %v463, %v459
        %v524 = vpack.c.b16 %v464, %v460
        %v525 = vpack.c.b16 %v465, %v461
        %v526 = vpack.c.b16 %v466, %v462
        %v527 = vpack.c.b16 %v471, %v467
        %v528 = vpack.c.b16 %v472, %v468
        %v529 = vpack.c.b16 %v473, %v469
        %v530 = vpack.c.b16 %v474, %v470
        %v531 = vpack.c.b16 %v479, %v475
        %v532 = vpack.c.b16 %v480, %v476
        %v533 = vpack.c.b16 %v481, %v477
        %v534 = vpack.c.b16 %v482, %v478
        %v535 = vpack.c.b16 %v487, %v483
        %v536 = vpack.c.b16 %v488, %v484
        %v537 = vpack.c.b16 %v489, %v485
        %v538 = vpack.c.b16 %v490, %v486
        %v539 = vpack.c.b16 %v495, %v491
        %v540 = vpack.c.b16 %v496, %v492
        %v541 = vpack.c.b16 %v497, %v493
        %v542 = vpack.c.b16 %v498, %v494
        %v543 = vpack.c.b16 %v503, %v499
        %v544 = vpack.c.b16 %v504, %v500
        %v545 = vpack.c.b16 %v505, %v501
        %v546 = vpack.c.b16 %v506, %v502
        %v547 = vpack.c.b16 %v511, %v507
        %v548 = vpack.c.b16 %v512, %v508
        %v549 = vpack.c.b16 %v513, %v509
        %v550 = vpack.c.b16 %v514, %v510
        %v551 = vpack.c.b16 %v519, %v515
        %v552 = vpack.c.b16 %v520, %v516
        %v553 = vpack.c.b16 %v521, %v517
        %v554 = vpack.c.b16 %v522, %v518
        %587 = vmatprep.subr.bf16.mxu0 %v552
        %588 = vmatpush1.bf16.msra.mxu0 %v551
        %589 = vmatprep.subr.bf16.mxu0 %v548
        %590 = vmatpush1.bf16.msra.mxu0 %v547
        %591 = vmatprep.subr.bf16.mxu0 %v544
        %592 = vmatpush1.bf16.msra.mxu0 %v543
        %593 = vmatprep.subr.bf16.mxu0 %v540
        %594 = vmatpush1.bf16.msra.mxu0 %v539
        %595 = vmatprep.subr.bf16.mxu0 %v536
        %596 = vmatpush1.bf16.msra.mxu0 %v535
        %597 = vmatprep.subr.bf16.mxu0 %v532
        %598 = vmatpush1.bf16.msra.mxu0 %v531
        %599 = vmatprep.subr.bf16.mxu0 %v528
        %600 = vmatpush1.bf16.msra.mxu0 %v527
        %601 = vmatprep.subr.bf16.mxu0 %v524
        %602 = vmatpush1.bf16.msra.mxu0 %v523
        %603 = vmatprep.subr.bf16.mxu0 0
        %604 = vmatpush2.bf16.msra.mxu0 0
        %605 = vmatprep.subr.bf16.mxu0 0
        %606 = vmatpush2.bf16.msra.mxu0 0
        %607 = vmatprep.subr.bf16.mxu0 0
        %608 = vmatpush2.bf16.msra.mxu0 0
        %609 = vmatprep.subr.bf16.mxu0 0
        %610 = vmatpush2.bf16.msra.mxu0 0
        %611 = vmatprep.subr.bf16.mxu0 0
        %612 = vmatpush2.bf16.msra.mxu0 0
        %613 = vmatprep.subr.bf16.mxu0 0
        %614 = vmatpush2.bf16.msra.mxu0 0
        %615 = vmatprep.subr.bf16.mxu0 0
        %616 = vmatpush2.bf16.msra.mxu0 0
        %617 = vmatprep.subr.bf16.mxu0 0
        %618 = vmatpush2.bf16.msra.mxu0 0
        %619 = vmatprep.mubr.bf16.mxu0 0
        %620 = vmatmul.mubr.bf16.gmra.mxu0 %v423
        %v621 = vpop.f32.mrf.mxu0
        %v622 = vadd.f32 0.0, %v621
        %v623 = vpop.f32.mrf.mxu0
        %v624 = vadd.f32 0.0, %v623
        %v625 = vpop.f32.mrf.mxu0
        %v626 = vadd.f32 0.0, %v625
        %v627 = vpop.f32.mrf.mxu0
        %v628 = vadd.f32 0.0, %v627
        %629 = vmatprep.mubr.bf16.mxu0 0
        %630 = vmatmul.mubr.bf16.gmra.mxu0 %v424
        %v631 = vpop.f32.mrf.mxu0
        %v632 = vadd.f32 0.0, %v631
        %v633 = vpop.f32.mrf.mxu0
        %v634 = vadd.f32 0.0, %v633
        %v635 = vpop.f32.mrf.mxu0
        %v636 = vadd.f32 0.0, %v635
        %v637 = vpop.f32.mrf.mxu0
        %v638 = vadd.f32 0.0, %v637
        %639 = vmatprep.mubr.bf16.mxu0 0
        %640 = vmatmul.mubr.bf16.gmra.mxu0 %v425
        %v641 = vpop.f32.mrf.mxu0
        %v642 = vadd.f32 0.0, %v641
        %v643 = vpop.f32.mrf.mxu0
        %v644 = vadd.f32 0.0, %v643
        %v645 = vpop.f32.mrf.mxu0
        %v646 = vadd.f32 0.0, %v645
        %v647 = vpop.f32.mrf.mxu0
        %v648 = vadd.f32 0.0, %v647
        %649 = vmatprep.mubr.bf16.mxu0 0
        %650 = vmatmul.mubr.bf16.gmra.mxu0 %v426
        %v651 = vpop.f32.mrf.mxu0
        %v652 = vadd.f32 0.0, %v651
        %v653 = vpop.f32.mrf.mxu0
        %v654 = vadd.f32 0.0, %v653
        %v655 = vpop.f32.mrf.mxu0
        %v656 = vadd.f32 0.0, %v655
        %v657 = vpop.f32.mrf.mxu0
        %v658 = vadd.f32 0.0, %v657
        %659 = vdwg.mxu0
        %660 = vmatprep.subr.bf16.mxu0 %v554
        %661 = vmatpush1.bf16.msra.mxu0 %v553
        %662 = vmatprep.subr.bf16.mxu0 %v550
        %663 = vmatpush1.bf16.msra.mxu0 %v549
        %664 = vmatprep.subr.bf16.mxu0 %v546
        %665 = vmatpush1.bf16.msra.mxu0 %v545
        %666 = vmatprep.subr.bf16.mxu0 %v542
        %667 = vmatpush1.bf16.msra.mxu0 %v541
        %668 = vmatprep.subr.bf16.mxu0 %v538
        %669 = vmatpush1.bf16.msra.mxu0 %v537
        %670 = vmatprep.subr.bf16.mxu0 %v534
        %671 = vmatpush1.bf16.msra.mxu0 %v533
        %672 = vmatprep.subr.bf16.mxu0 %v530
        %673 = vmatpush1.bf16.msra.mxu0 %v529
        %674 = vmatprep.subr.bf16.mxu0 %v526
        %675 = vmatpush1.bf16.msra.mxu0 %v525
        %676 = vmatprep.subr.bf16.mxu0 0
        %677 = vmatpush2.bf16.msra.mxu0 0
        %678 = vmatprep.subr.bf16.mxu0 0
        %679 = vmatpush2.bf16.msra.mxu0 0
        %680 = vmatprep.subr.bf16.mxu0 0
        %681 = vmatpush2.bf16.msra.mxu0 0
        %682 = vmatprep.subr.bf16.mxu0 0
        %683 = vmatpush2.bf16.msra.mxu0 0
        %684 = vmatprep.subr.bf16.mxu0 0
        %685 = vmatpush2.bf16.msra.mxu0 0
        %686 = vmatprep.subr.bf16.mxu0 0
        %687 = vmatpush2.bf16.msra.mxu0 0
        %688 = vmatprep.subr.bf16.mxu0 0
        %689 = vmatpush2.bf16.msra.mxu0 0
        %690 = vmatprep.subr.bf16.mxu0 0
        %691 = vmatpush2.bf16.msra.mxu0 0
        %692 = vmatprep.mubr.bf16.mxu0 0
        %693 = vmatmul.mubr.bf16.gmra.mxu0 %v423
        %v694 = vpop.f32.mrf.mxu0
        %v695 = vadd.f32 0.0, %v694
        %v696 = vpop.f32.mrf.mxu0
        %v697 = vadd.f32 0.0, %v696
        %v698 = vpop.f32.mrf.mxu0
        %v699 = vadd.f32 0.0, %v698
        %v700 = vpop.f32.mrf.mxu0
        %v701 = vadd.f32 0.0, %v700
        %702 = vmatprep.mubr.bf16.mxu0 0
        %703 = vmatmul.mubr.bf16.gmra.mxu0 %v424
        %v704 = vpop.f32.mrf.mxu0
        %v705 = vadd.f32 0.0, %v704
        %v706 = vpop.f32.mrf.mxu0
        %v707 = vadd.f32 0.0, %v706
        %v708 = vpop.f32.mrf.mxu0
        %v709 = vadd.f32 0.0, %v708
        %v710 = vpop.f32.mrf.mxu0
        %v711 = vadd.f32 0.0, %v710
        %712 = vmatprep.mubr.bf16.mxu0 0
        %713 = vmatmul.mubr.bf16.gmra.mxu0 %v425
        %v714 = vpop.f32.mrf.mxu0
        %v715 = vadd.f32 0.0, %v714
        %v716 = vpop.f32.mrf.mxu0
        %v717 = vadd.f32 0.0, %v716
        %v718 = vpop.f32.mrf.mxu0
        %v719 = vadd.f32 0.0, %v718
        %v720 = vpop.f32.mrf.mxu0
        %v721 = vadd.f32 0.0, %v720
        %722 = vmatprep.mubr.bf16.mxu0 0
        %723 = vmatmul.mubr.bf16.gmra.mxu0 %v426
        %v724 = vpop.f32.mrf.mxu0
        %v725 = vadd.f32 0.0, %v724
        %v726 = vpop.f32.mrf.mxu0
        %v727 = vadd.f32 0.0, %v726
        %v728 = vpop.f32.mrf.mxu0
        %v729 = vadd.f32 0.0, %v728
        %v730 = vpop.f32.mrf.mxu0
        %v731 = vadd.f32 0.0, %v730
        %732 = vdwg.mxu0
        %v733 = vld [vmem:[%s324] sm:$0xf]
        %v735 = vlaneseq
        %v736 = vshrl.u32 %v735, 7
        %v737 = vsub.s32 0, %v736
        %v738 = vrot.slane %v733, %v737
        %v739 = vlaneseq
        %v740 = vshrl.u32 %v739, 7
        %v741 = vsub.s32 1, %v740
        %v742 = vrot.slane %v733, %v741
        %v743 = vlaneseq
        %v744 = vshrl.u32 %v743, 7
        %v745 = vsub.s32 2, %v744
        %v746 = vrot.slane %v733, %v745
        %v747 = vlaneseq
        %v748 = vshrl.u32 %v747, 7
        %v749 = vsub.s32 3, %v748
        %v750 = vrot.slane %v733, %v749
        %v755 = vadd.f32 %v622, %v738
        %v756 = vadd.f32 %v624, %v742
        %v757 = vadd.f32 %v695, %v746
        %v758 = vadd.f32 %v697, %v750
        %v759 = vadd.f32 %v626, %v738
        %v760 = vadd.f32 %v628, %v742
        %v761 = vadd.f32 %v699, %v746
        %v762 = vadd.f32 %v701, %v750
        %v763 = vadd.f32 %v632, %v738
        %v764 = vadd.f32 %v634, %v742
        %v765 = vadd.f32 %v705, %v746
        %v766 = vadd.f32 %v707, %v750
        %v767 = vadd.f32 %v636, %v738
        %v768 = vadd.f32 %v638, %v742
        %v769 = vadd.f32 %v709, %v746
        %v770 = vadd.f32 %v711, %v750
        %v771 = vadd.f32 %v642, %v738
        %v772 = vadd.f32 %v644, %v742
        %v773 = vadd.f32 %v715, %v746
        %v774 = vadd.f32 %v717, %v750
        %v775 = vadd.f32 %v646, %v738
        %v776 = vadd.f32 %v648, %v742
        %v777 = vadd.f32 %v719, %v746
        %v778 = vadd.f32 %v721, %v750
        %v779 = vadd.f32 %v652, %v738
        %v780 = vadd.f32 %v654, %v742
        %v781 = vadd.f32 %v725, %v746
        %v782 = vadd.f32 %v727, %v750
        %v783 = vadd.f32 %v656, %v738
        %v784 = vadd.f32 %v658, %v742
        %v785 = vadd.f32 %v729, %v746
        %v786 = vadd.f32 %v731, %v750
        %787 = vst [vmem:[#allocation3] sm:$0xff] %v755
        %788 = vst [vmem:[#allocation3 + $0x8] sm:$0xff] %v756
        %789 = vst [vmem:[#allocation3 + $0x10] sm:$0xff] %v757
        %790 = vst [vmem:[#allocation3 + $0x18] sm:$0xff] %v758
        %791 = vst [vmem:[#allocation3 + $0x20] sm:$0xff] %v759
        %792 = vst [vmem:[#allocation3 + $0x28] sm:$0xff] %v760
        %793 = vst [vmem:[#allocation3 + $0x30] sm:$0xff] %v761
        %794 = vst [vmem:[#allocation3 + $0x38] sm:$0xff] %v762
        %795 = vst [vmem:[#allocation3 + $0x40] sm:$0xff] %v763
        %796 = vst [vmem:[#allocation3 + $0x48] sm:$0xff] %v764
        %797 = vst [vmem:[#allocation3 + $0x50] sm:$0xff] %v765
        %798 = vst [vmem:[#allocation3 + $0x58] sm:$0xff] %v766
        %799 = vst [vmem:[#allocation3 + $0x60] sm:$0xff] %v767
        %800 = vst [vmem:[#allocation3 + $0x68] sm:$0xff] %v768
        %801 = vst [vmem:[#allocation3 + $0x70] sm:$0xff] %v769
        %802 = vst [vmem:[#allocation3 + $0x78] sm:$0xff] %v770
        %803 = vst [vmem:[#allocation3 + $0x80] sm:$0xff] %v771
        %804 = vst [vmem:[#allocation3 + $0x88] sm:$0xff] %v772
        %805 = vst [vmem:[#allocation3 + $0x90] sm:$0xff] %v773
        %806 = vst [vmem:[#allocation3 + $0x98] sm:$0xff] %v774
        %807 = vst [vmem:[#allocation3 + $0xa0] sm:$0xff] %v775
        %808 = vst [vmem:[#allocation3 + $0xa8] sm:$0xff] %v776
        %809 = vst [vmem:[#allocation3 + $0xb0] sm:$0xff] %v777
        %810 = vst [vmem:[#allocation3 + $0xb8] sm:$0xff] %v778
        %811 = vst [vmem:[#allocation3 + $0xc0] sm:$0xff] %v779
        %812 = vst [vmem:[#allocation3 + $0xc8] sm:$0xff] %v780
        %813 = vst [vmem:[#allocation3 + $0xd0] sm:$0xff] %v781
        %814 = vst [vmem:[#allocation3 + $0xd8] sm:$0xff] %v782
        %815 = vst [vmem:[#allocation3 + $0xe0] sm:$0xff] %v783
        %816 = vst [vmem:[#allocation3 + $0xe8] sm:$0xff] %v784
        %817 = vst [vmem:[#allocation3 + $0xf0] sm:$0xff] %v785
        %818 = vst [vmem:[#allocation3 + $0xf8] sm:$0xff] %v786
        %v819 = vld [vmem:[%s315] sm:$0xff]
        %v820 = vld [vmem:[%s315 + $0x8] sm:$0xff]
        %v821 = vld [vmem:[%s315 + $0x10] sm:$0xff]
        %v822 = vld [vmem:[%s315 + $0x18] sm:$0xff]
        %v823 = vld [vmem:[%s315 + $0x20] sm:$0xff]
        %v824 = vld [vmem:[%s315 + $0x28] sm:$0xff]
        %v825 = vld [vmem:[%s315 + $0x30] sm:$0xff]
        %v826 = vld [vmem:[%s315 + $0x38] sm:$0xff]
        %v827 = vld [vmem:[%s315 + $0x40] sm:$0xff]
        %v828 = vld [vmem:[%s315 + $0x48] sm:$0xff]
        %v829 = vld [vmem:[%s315 + $0x50] sm:$0xff]
        %v830 = vld [vmem:[%s315 + $0x58] sm:$0xff]
        %v831 = vld [vmem:[%s315 + $0x60] sm:$0xff]
        %v832 = vld [vmem:[%s315 + $0x68] sm:$0xff]
        %v833 = vld [vmem:[%s315 + $0x70] sm:$0xff]
        %v834 = vld [vmem:[%s315 + $0x78] sm:$0xff]
        %v835 = vld [vmem:[%s315 + $0x80] sm:$0xff]
        %v836 = vld [vmem:[%s315 + $0x88] sm:$0xff]
        %v837 = vld [vmem:[%s315 + $0x90] sm:$0xff]
        %v838 = vld [vmem:[%s315 + $0x98] sm:$0xff]
        %v839 = vld [vmem:[%s315 + $0xa0] sm:$0xff]
        %v840 = vld [vmem:[%s315 + $0xa8] sm:$0xff]
        %v841 = vld [vmem:[%s315 + $0xb0] sm:$0xff]
        %v842 = vld [vmem:[%s315 + $0xb8] sm:$0xff]
        %v843 = vld [vmem:[%s315 + $0xc0] sm:$0xff]
        %v844 = vld [vmem:[%s315 + $0xc8] sm:$0xff]
        %v845 = vld [vmem:[%s315 + $0xd0] sm:$0xff]
        %v846 = vld [vmem:[%s315 + $0xd8] sm:$0xff]
        %v847 = vld [vmem:[%s315 + $0xe0] sm:$0xff]
        %v848 = vld [vmem:[%s315 + $0xe8] sm:$0xff]
        %v849 = vld [vmem:[%s315 + $0xf0] sm:$0xff]
        %v850 = vld [vmem:[%s315 + $0xf8] sm:$0xff]
        %851 = vst [vmem:[#allocation4] sm:$0xff] 0.0
        %852 = vst [vmem:[#allocation5] sm:$0xff] 0.0
        %v853 = vld [vmem:[#allocation3] sm:$0xff]
        %v854 = vld [vmem:[#allocation3 + $0x8] sm:$0xff]
        %v855 = vld [vmem:[#allocation3 + $0x10] sm:$0xff]
        %v856 = vld [vmem:[#allocation3 + $0x18] sm:$0xff]
        %v857 = vld [vmem:[#allocation4] sm:$0xff]
        %v858 = vpack.c.bf16 %v857, %v857
        %v891 = vunpack.c.l.b16 %v819
        %v892 = vunpack.c.h.b16 %v819
        %v893 = vunpack.c.l.b16 %v820
        %v894 = vunpack.c.h.b16 %v820
        %v895 = vunpack.c.l.b16 %v821
        %v896 = vunpack.c.h.b16 %v821
        %v897 = vunpack.c.l.b16 %v822
        %v898 = vunpack.c.h.b16 %v822
        %v899 = vunpack.c.l.b16 %v823
        %v900 = vunpack.c.h.b16 %v823
        %v901 = vunpack.c.l.b16 %v824
        %v902 = vunpack.c.h.b16 %v824
        %v903 = vunpack.c.l.b16 %v825
        %v904 = vunpack.c.h.b16 %v825
        %v905 = vunpack.c.l.b16 %v826
        %v906 = vunpack.c.h.b16 %v826
        %v907 = vunpack.c.l.b16 %v827
        %v908 = vunpack.c.h.b16 %v827
        %v909 = vunpack.c.l.b16 %v828
        %v910 = vunpack.c.h.b16 %v828
        %v911 = vunpack.c.l.b16 %v829
        %v912 = vunpack.c.h.b16 %v829
        %v913 = vunpack.c.l.b16 %v830
        %v914 = vunpack.c.h.b16 %v830
        %v915 = vunpack.c.l.b16 %v831
        %v916 = vunpack.c.h.b16 %v831
        %v917 = vunpack.c.l.b16 %v832
        %v918 = vunpack.c.h.b16 %v832
        %v919 = vunpack.c.l.b16 %v833
        %v920 = vunpack.c.h.b16 %v833
        %v921 = vunpack.c.l.b16 %v834
        %v922 = vunpack.c.h.b16 %v834
        %v923 = vunpack.c.l.b16 %v835
        %v924 = vunpack.c.h.b16 %v835
        %v925 = vunpack.c.l.b16 %v836
        %v926 = vunpack.c.h.b16 %v836
        %v927 = vunpack.c.l.b16 %v837
        %v928 = vunpack.c.h.b16 %v837
        %v929 = vunpack.c.l.b16 %v838
        %v930 = vunpack.c.h.b16 %v838
        %v931 = vunpack.c.l.b16 %v839
        %v932 = vunpack.c.h.b16 %v839
        %v933 = vunpack.c.l.b16 %v840
        %v934 = vunpack.c.h.b16 %v840
        %v935 = vunpack.c.l.b16 %v841
        %v936 = vunpack.c.h.b16 %v841
        %v937 = vunpack.c.l.b16 %v842
        %v938 = vunpack.c.h.b16 %v842
        %v939 = vunpack.c.l.b16 %v843
        %v940 = vunpack.c.h.b16 %v843
        %v941 = vunpack.c.l.b16 %v844
        %v942 = vunpack.c.h.b16 %v844
        %v943 = vunpack.c.l.b16 %v845
        %v944 = vunpack.c.h.b16 %v845
        %v945 = vunpack.c.l.b16 %v846
        %v946 = vunpack.c.h.b16 %v846
        %v947 = vunpack.c.l.b16 %v847
        %v948 = vunpack.c.h.b16 %v847
        %v949 = vunpack.c.l.b16 %v848
        %v950 = vunpack.c.h.b16 %v848
        %v951 = vunpack.c.l.b16 %v849
        %v952 = vunpack.c.h.b16 %v849
        %v953 = vunpack.c.l.b16 %v850
        %v954 = vunpack.c.h.b16 %v850
        %v955 = vpack.c.b16 %v895, %v891
        %v956 = vpack.c.b16 %v896, %v892
        %v957 = vpack.c.b16 %v897, %v893
        %v958 = vpack.c.b16 %v898, %v894
        %v959 = vpack.c.b16 %v903, %v899
        %v960 = vpack.c.b16 %v904, %v900
        %v961 = vpack.c.b16 %v905, %v901
        %v962 = vpack.c.b16 %v906, %v902
        %v963 = vpack.c.b16 %v911, %v907
        %v964 = vpack.c.b16 %v912, %v908
        %v965 = vpack.c.b16 %v913, %v909
        %v966 = vpack.c.b16 %v914, %v910
        %v967 = vpack.c.b16 %v919, %v915
        %v968 = vpack.c.b16 %v920, %v916
        %v969 = vpack.c.b16 %v921, %v917
        %v970 = vpack.c.b16 %v922, %v918
        %v971 = vpack.c.b16 %v927, %v923
        %v972 = vpack.c.b16 %v928, %v924
        %v973 = vpack.c.b16 %v929, %v925
        %v974 = vpack.c.b16 %v930, %v926
        %v975 = vpack.c.b16 %v935, %v931
        %v976 = vpack.c.b16 %v936, %v932
        %v977 = vpack.c.b16 %v937, %v933
        %v978 = vpack.c.b16 %v938, %v934
        %v979 = vpack.c.b16 %v943, %v939
        %v980 = vpack.c.b16 %v944, %v940
        %v981 = vpack.c.b16 %v945, %v941
        %v982 = vpack.c.b16 %v946, %v942
        %v983 = vpack.c.b16 %v951, %v947
        %v984 = vpack.c.b16 %v952, %v948
        %v985 = vpack.c.b16 %v953, %v949
        %v986 = vpack.c.b16 %v954, %v950
        %1019 = vmatprep.subr.bf16.mxu0 %v984
        %1020 = vmatpush1.bf16.msra.mxu0 %v983
        %1021 = vmatprep.subr.bf16.mxu0 %v980
        %1022 = vmatpush1.bf16.msra.mxu0 %v979
        %1023 = vmatprep.subr.bf16.mxu0 %v976
        %1024 = vmatpush1.bf16.msra.mxu0 %v975
        %1025 = vmatprep.subr.bf16.mxu0 %v972
        %1026 = vmatpush1.bf16.msra.mxu0 %v971
        %1027 = vmatprep.subr.bf16.mxu0 %v968
        %1028 = vmatpush1.bf16.msra.mxu0 %v967
        %1029 = vmatprep.subr.bf16.mxu0 %v964
        %1030 = vmatpush1.bf16.msra.mxu0 %v963
        %1031 = vmatprep.subr.bf16.mxu0 %v960
        %1032 = vmatpush1.bf16.msra.mxu0 %v959
        %1033 = vmatprep.subr.bf16.mxu0 %v956
        %1034 = vmatpush1.bf16.msra.mxu0 %v955
        %1035 = vmatprep.subr.bf16.mxu0 0
        %1036 = vmatpush2.bf16.msra.mxu0 0
        %1037 = vmatprep.subr.bf16.mxu0 0
        %1038 = vmatpush2.bf16.msra.mxu0 0
        %1039 = vmatprep.subr.bf16.mxu0 0
        %1040 = vmatpush2.bf16.msra.mxu0 0
        %1041 = vmatprep.subr.bf16.mxu0 0
        %1042 = vmatpush2.bf16.msra.mxu0 0
        %1043 = vmatprep.subr.bf16.mxu0 0
        %1044 = vmatpush2.bf16.msra.mxu0 0
        %1045 = vmatprep.subr.bf16.mxu0 0
        %1046 = vmatpush2.bf16.msra.mxu0 0
        %1047 = vmatprep.subr.bf16.mxu0 0
        %1048 = vmatpush2.bf16.msra.mxu0 0
        %1049 = vmatprep.subr.bf16.mxu0 0
        %1050 = vmatpush2.bf16.msra.mxu0 0
        %1051 = vmatprep.mubr.bf16.mxu0 0
        %1052 = vmatmul.mubr.bf16.gmra.mxu0 %v858
        %v1053 = vpop.f32.mrf.mxu0
        %v1054 = vadd.f32 0.0, %v1053
        %v1055 = vpop.f32.mrf.mxu0
        %v1056 = vadd.f32 0.0, %v1055
        %v1057 = vpop.f32.mrf.mxu0
        %v1058 = vpop.f32.mrf.mxu0
        %1059 = vdwg.mxu0
        %1060 = vmatprep.subr.bf16.mxu0 %v986
        %1061 = vmatpush1.bf16.msra.mxu0 %v985
        %1062 = vmatprep.subr.bf16.mxu0 %v982
        %1063 = vmatpush1.bf16.msra.mxu0 %v981
        %1064 = vmatprep.subr.bf16.mxu0 %v978
        %1065 = vmatpush1.bf16.msra.mxu0 %v977
        %1066 = vmatprep.subr.bf16.mxu0 %v974
        %1067 = vmatpush1.bf16.msra.mxu0 %v973
        %1068 = vmatprep.subr.bf16.mxu0 %v970
        %1069 = vmatpush1.bf16.msra.mxu0 %v969
        %1070 = vmatprep.subr.bf16.mxu0 %v966
        %1071 = vmatpush1.bf16.msra.mxu0 %v965
        %1072 = vmatprep.subr.bf16.mxu0 %v962
        %1073 = vmatpush1.bf16.msra.mxu0 %v961
        %1074 = vmatprep.subr.bf16.mxu0 %v958
        %1075 = vmatpush1.bf16.msra.mxu0 %v957
        %1076 = vmatprep.subr.bf16.mxu0 0
        %1077 = vmatpush2.bf16.msra.mxu0 0
        %1078 = vmatprep.subr.bf16.mxu0 0
        %1079 = vmatpush2.bf16.msra.mxu0 0
        %1080 = vmatprep.subr.bf16.mxu0 0
        %1081 = vmatpush2.bf16.msra.mxu0 0
        %1082 = vmatprep.subr.bf16.mxu0 0
        %1083 = vmatpush2.bf16.msra.mxu0 0
        %1084 = vmatprep.subr.bf16.mxu0 0
        %1085 = vmatpush2.bf16.msra.mxu0 0
        %1086 = vmatprep.subr.bf16.mxu0 0
        %1087 = vmatpush2.bf16.msra.mxu0 0
        %1088 = vmatprep.subr.bf16.mxu0 0
        %1089 = vmatpush2.bf16.msra.mxu0 0
        %1090 = vmatprep.subr.bf16.mxu0 0
        %1091 = vmatpush2.bf16.msra.mxu0 0
        %1092 = vmatprep.mubr.bf16.mxu0 0
        %1093 = vmatmul.mubr.bf16.gmra.mxu0 %v858
        %v1094 = vpop.f32.mrf.mxu0
        %v1095 = vadd.f32 0.0, %v1094
        %v1096 = vpop.f32.mrf.mxu0
        %v1097 = vadd.f32 0.0, %v1096
        %v1098 = vpop.f32.mrf.mxu0
        %v1099 = vpop.f32.mrf.mxu0
        %1100 = vdwg.mxu0
        %v1101 = vadd.f32 %v853, %v1054
        %v1102 = vadd.f32 %v854, %v1056
        %v1103 = vadd.f32 %v855, %v1095
        %v1104 = vadd.f32 %v856, %v1097
        %v1105 = vxor.u32 %v1101, 2147483648
        %v1106 = vxor.u32 %v1102, 2147483648
        %v1107 = vxor.u32 %v1103, 2147483648
        %v1108 = vmul.f32 %v1105, 1.442695
        %v1109 = vpow.pop %v1108
        %v1110 = vmul.f32 %v1106, 1.442695
        %v1111 = vpow.pop %v1110
        %v1112 = vmul.f32 %v1107, 1.442695
        %v1113 = vpow.pop %v1112
        %v1114 = vadd.f32 %v1109, 1.0
        %v1115 = vadd.f32 %v1111, 1.0
        %v1116 = vadd.f32 %v1113, 1.0
        %v1117 = vrcp.pop %v1114
        %v1118 = vmul.f32 1.0, %v1117
        %v1119 = vrcp.pop %v1115
        %v1120 = vmul.f32 1.0, %v1119
        %v1121 = vrcp.pop %v1116
        %v1122 = vmul.f32 1.0, %v1121
        %v1123 = vtanh.pop %v1104
        %v1124 = vld [vmem:[#allocation5] sm:$0xff]
        %v1125 = vmul.f32 %v1120, %v1124
        %v1126 = vmul.f32 %v1118, %v1123
        %v1127 = vadd.f32 %v1125, %v1126
        %v1128 = vtanh.pop %v1127
        %v1129 = vmul.f32 %v1122, %v1128
        %1130 = vst [vmem:[#allocation5] sm:$0xff] %v1127
        %1131 = vst [vmem:[#allocation4] sm:$0xff] %v1129
        %1132 = vst [vmem:[#allocation2] sm:$0xff] %v1129
        %s1133 = scalar_lea.vmem [#allocation3], 32
        %v1134 = vld [vmem:[%s1133] sm:$0xff]
        %v1135 = vld [vmem:[%s1133 + $0x8] sm:$0xff]
        %v1136 = vld [vmem:[%s1133 + $0x10] sm:$0xff]
        %v1137 = vld [vmem:[%s1133 + $0x18] sm:$0xff]
        %v1138 = vld [vmem:[#allocation4] sm:$0xff]
        %v1139 = vpack.c.bf16 %v1138, %v1138
        %1140 = vmatprep.subr.bf16.mxu0 %v984
        %1141 = vmatpush1.bf16.msra.mxu0 %v983
        %1142 = vmatprep.subr.bf16.mxu0 %v980
        %1143 = vmatpush1.bf16.msra.mxu0 %v979
        %1144 = vmatprep.subr.bf16.mxu0 %v976
        %1145 = vmatpush1.bf16.msra.mxu0 %v975
        %1146 = vmatprep.subr.bf16.mxu0 %v972
        %1147 = vmatpush1.bf16.msra.mxu0 %v971
        %1148 = vmatprep.subr.bf16.mxu0 %v968
        %1149 = vmatpush1.bf16.msra.mxu0 %v967
        %1150 = vmatprep.subr.bf16.mxu0 %v964
        %1151 = vmatpush1.bf16.msra.mxu0 %v963
        %1152 = vmatprep.subr.bf16.mxu0 %v960
        %1153 = vmatpush1.bf16.msra.mxu0 %v959
        %1154 = vmatprep.subr.bf16.mxu0 %v956
        %1155 = vmatpush1.bf16.msra.mxu0 %v955
        %1156 = vmatprep.subr.bf16.mxu0 0
        %1157 = vmatpush2.bf16.msra.mxu0 0
        %1158 = vmatprep.subr.bf16.mxu0 0
        %1159 = vmatpush2.bf16.msra.mxu0 0
        %1160 = vmatprep.subr.bf16.mxu0 0
        %1161 = vmatpush2.bf16.msra.mxu0 0
        %1162 = vmatprep.subr.bf16.mxu0 0
        %1163 = vmatpush2.bf16.msra.mxu0 0
        %1164 = vmatprep.subr.bf16.mxu0 0
        %1165 = vmatpush2.bf16.msra.mxu0 0
        %1166 = vmatprep.subr.bf16.mxu0 0
        %1167 = vmatpush2.bf16.msra.mxu0 0
        %1168 = vmatprep.subr.bf16.mxu0 0
        %1169 = vmatpush2.bf16.msra.mxu0 0
        %1170 = vmatprep.subr.bf16.mxu0 0
        %1171 = vmatpush2.bf16.msra.mxu0 0
        %1172 = vmatprep.mubr.bf16.mxu0 0
        %1173 = vmatmul.mubr.bf16.gmra.mxu0 %v1139
        %v1174 = vpop.f32.mrf.mxu0
        %v1175 = vadd.f32 0.0, %v1174
        %v1176 = vpop.f32.mrf.mxu0
        %v1177 = vadd.f32 0.0, %v1176
        %v1178 = vpop.f32.mrf.mxu0
        %v1179 = vpop.f32.mrf.mxu0
        %1180 = vdwg.mxu0
        %1181 = vmatprep.subr.bf16.mxu0 %v986
        %1182 = vmatpush1.bf16.msra.mxu0 %v985
        %1183 = vmatprep.subr.bf16.mxu0 %v982
        %1184 = vmatpush1.bf16.msra.mxu0 %v981
        %1185 = vmatprep.subr.bf16.mxu0 %v978
        %1186 = vmatpush1.bf16.msra.mxu0 %v977
        %1187 = vmatprep.subr.bf16.mxu0 %v974
        %1188 = vmatpush1.bf16.msra.mxu0 %v973
        %1189 = vmatprep.subr.bf16.mxu0 %v970
        %1190 = vmatpush1.bf16.msra.mxu0 %v969
        %1191 = vmatprep.subr.bf16.mxu0 %v966
        %1192 = vmatpush1.bf16.msra.mxu0 %v965
        %1193 = vmatprep.subr.bf16.mxu0 %v962
        %1194 = vmatpush1.bf16.msra.mxu0 %v961
        %1195 = vmatprep.subr.bf16.mxu0 %v958
        %1196 = vmatpush1.bf16.msra.mxu0 %v957
        %1197 = vmatprep.subr.bf16.mxu0 0
        %1198 = vmatpush2.bf16.msra.mxu0 0
        %1199 = vmatprep.subr.bf16.mxu0 0
        %1200 = vmatpush2.bf16.msra.mxu0 0
        %1201 = vmatprep.subr.bf16.mxu0 0
        %1202 = vmatpush2.bf16.msra.mxu0 0
        %1203 = vmatprep.subr.bf16.mxu0 0
        %1204 = vmatpush2.bf16.msra.mxu0 0
        %1205 = vmatprep.subr.bf16.mxu0 0
        %1206 = vmatpush2.bf16.msra.mxu0 0
        %1207 = vmatprep.subr.bf16.mxu0 0
        %1208 = vmatpush2.bf16.msra.mxu0 0
        %1209 = vmatprep.subr.bf16.mxu0 0
        %1210 = vmatpush2.bf16.msra.mxu0 0
        %1211 = vmatprep.subr.bf16.mxu0 0
        %1212 = vmatpush2.bf16.msra.mxu0 0
        %1213 = vmatprep.mubr.bf16.mxu0 0
        %1214 = vmatmul.mubr.bf16.gmra.mxu0 %v1139
        %v1215 = vpop.f32.mrf.mxu0
        %v1216 = vadd.f32 0.0, %v1215
        %v1217 = vpop.f32.mrf.mxu0
        %v1218 = vadd.f32 0.0, %v1217
        %v1219 = vpop.f32.mrf.mxu0
        %v1220 = vpop.f32.mrf.mxu0
        %1221 = vdwg.mxu0
        %v1222 = vadd.f32 %v1134, %v1175
        %v1223 = vadd.f32 %v1135, %v1177
        %v1224 = vadd.f32 %v1136, %v1216
        %v1225 = vadd.f32 %v1137, %v1218
        %v1226 = vxor.u32 %v1222, 2147483648
        %v1227 = vxor.u32 %v1223, 2147483648
        %v1228 = vxor.u32 %v1224, 2147483648
        %v1229 = vmul.f32 %v1226, 1.442695
        %v1230 = vpow.pop %v1229
        %v1231 = vmul.f32 %v1227, 1.442695
        %v1232 = vpow.pop %v1231
        %v1233 = vmul.f32 %v1228, 1.442695
        %v1234 = vpow.pop %v1233
        %v1235 = vadd.f32 %v1230, 1.0
        %v1236 = vadd.f32 %v1232, 1.0
        %v1237 = vadd.f32 %v1234, 1.0
        %v1238 = vrcp.pop %v1235
        %v1239 = vmul.f32 1.0, %v1238
        %v1240 = vrcp.pop %v1236
        %v1241 = vmul.f32 1.0, %v1240
        %v1242 = vrcp.pop %v1237
        %v1243 = vmul.f32 1.0, %v1242
        %v1244 = vtanh.pop %v1225
        %v1245 = vld [vmem:[#allocation5] sm:$0xff]
        %v1246 = vmul.f32 %v1241, %v1245
        %v1247 = vmul.f32 %v1239, %v1244
        %v1248 = vadd.f32 %v1246, %v1247
        %v1249 = vtanh.pop %v1248
        %v1250 = vmul.f32 %v1243, %v1249
        %1251 = vst [vmem:[#allocation5] sm:$0xff] %v1248
        %1252 = vst [vmem:[#allocation4] sm:$0xff] %v1250
        %s1253 = scalar_lea.vmem [#allocation2], 8
        %1254 = vst [vmem:[%s1253] sm:$0xff] %v1250
        %s1255 = scalar_lea.vmem [#allocation3], 64
        %v1256 = vld [vmem:[%s1255] sm:$0xff]
        %v1257 = vld [vmem:[%s1255 + $0x8] sm:$0xff]
        %v1258 = vld [vmem:[%s1255 + $0x10] sm:$0xff]
        %v1259 = vld [vmem:[%s1255 + $0x18] sm:$0xff]
        %v1260 = vld [vmem:[#allocation4] sm:$0xff]
        %v1261 = vpack.c.bf16 %v1260, %v1260
        %1262 = vmatprep.subr.bf16.mxu0 %v984
        %1263 = vmatpush1.bf16.msra.mxu0 %v983
        %1264 = vmatprep.subr.bf16.mxu0 %v980
        %1265 = vmatpush1.bf16.msra.mxu0 %v979
        %1266 = vmatprep.subr.bf16.mxu0 %v976
        %1267 = vmatpush1.bf16.msra.mxu0 %v975
        %1268 = vmatprep.subr.bf16.mxu0 %v972
        %1269 = vmatpush1.bf16.msra.mxu0 %v971
        %1270 = vmatprep.subr.bf16.mxu0 %v968
        %1271 = vmatpush1.bf16.msra.mxu0 %v967
        %1272 = vmatprep.subr.bf16.mxu0 %v964
        %1273 = vmatpush1.bf16.msra.mxu0 %v963
        %1274 = vmatprep.subr.bf16.mxu0 %v960
        %1275 = vmatpush1.bf16.msra.mxu0 %v959
        %1276 = vmatprep.subr.bf16.mxu0 %v956
        %1277 = vmatpush1.bf16.msra.mxu0 %v955
        %1278 = vmatprep.subr.bf16.mxu0 0
        %1279 = vmatpush2.bf16.msra.mxu0 0
        %1280 = vmatprep.subr.bf16.mxu0 0
        %1281 = vmatpush2.bf16.msra.mxu0 0
        %1282 = vmatprep.subr.bf16.mxu0 0
        %1283 = vmatpush2.bf16.msra.mxu0 0
        %1284 = vmatprep.subr.bf16.mxu0 0
        %1285 = vmatpush2.bf16.msra.mxu0 0
        %1286 = vmatprep.subr.bf16.mxu0 0
        %1287 = vmatpush2.bf16.msra.mxu0 0
        %1288 = vmatprep.subr.bf16.mxu0 0
        %1289 = vmatpush2.bf16.msra.mxu0 0
        %1290 = vmatprep.subr.bf16.mxu0 0
        %1291 = vmatpush2.bf16.msra.mxu0 0
        %1292 = vmatprep.subr.bf16.mxu0 0
        %1293 = vmatpush2.bf16.msra.mxu0 0
        %1294 = vmatprep.mubr.bf16.mxu0 0
        %1295 = vmatmul.mubr.bf16.gmra.mxu0 %v1261
        %v1296 = vpop.f32.mrf.mxu0
        %v1297 = vadd.f32 0.0, %v1296
        %v1298 = vpop.f32.mrf.mxu0
        %v1299 = vadd.f32 0.0, %v1298
        %v1300 = vpop.f32.mrf.mxu0
        %v1301 = vpop.f32.mrf.mxu0
        %1302 = vdwg.mxu0
        %1303 = vmatprep.subr.bf16.mxu0 %v986
        %1304 = vmatpush1.bf16.msra.mxu0 %v985
        %1305 = vmatprep.subr.bf16.mxu0 %v982
        %1306 = vmatpush1.bf16.msra.mxu0 %v981
        %1307 = vmatprep.subr.bf16.mxu0 %v978
        %1308 = vmatpush1.bf16.msra.mxu0 %v977
        %1309 = vmatprep.subr.bf16.mxu0 %v974
        %1310 = vmatpush1.bf16.msra.mxu0 %v973
        %1311 = vmatprep.subr.bf16.mxu0 %v970
        %1312 = vmatpush1.bf16.msra.mxu0 %v969
        %1313 = vmatprep.subr.bf16.mxu0 %v966
        %1314 = vmatpush1.bf16.msra.mxu0 %v965
        %1315 = vmatprep.subr.bf16.mxu0 %v962
        %1316 = vmatpush1.bf16.msra.mxu0 %v961
        %1317 = vmatprep.subr.bf16.mxu0 %v958
        %1318 = vmatpush1.bf16.msra.mxu0 %v957
        %1319 = vmatprep.subr.bf16.mxu0 0
        %1320 = vmatpush2.bf16.msra.mxu0 0
        %1321 = vmatprep.subr.bf16.mxu0 0
        %1322 = vmatpush2.bf16.msra.mxu0 0
        %1323 = vmatprep.subr.bf16.mxu0 0
        %1324 = vmatpush2.bf16.msra.mxu0 0
        %1325 = vmatprep.subr.bf16.mxu0 0
        %1326 = vmatpush2.bf16.msra.mxu0 0
        %1327 = vmatprep.subr.bf16.mxu0 0
        %1328 = vmatpush2.bf16.msra.mxu0 0
        %1329 = vmatprep.subr.bf16.mxu0 0
        %1330 = vmatpush2.bf16.msra.mxu0 0
        %1331 = vmatprep.subr.bf16.mxu0 0
        %1332 = vmatpush2.bf16.msra.mxu0 0
        %1333 = vmatprep.subr.bf16.mxu0 0
        %1334 = vmatpush2.bf16.msra.mxu0 0
        %1335 = vmatprep.mubr.bf16.mxu0 0
        %1336 = vmatmul.mubr.bf16.gmra.mxu0 %v1261
        %v1337 = vpop.f32.mrf.mxu0
        %v1338 = vadd.f32 0.0, %v1337
        %v1339 = vpop.f32.mrf.mxu0
        %v1340 = vadd.f32 0.0, %v1339
        %v1341 = vpop.f32.mrf.mxu0
        %v1342 = vpop.f32.mrf.mxu0
        %1343 = vdwg.mxu0
        %v1344 = vadd.f32 %v1256, %v1297
        %v1345 = vadd.f32 %v1257, %v1299
        %v1346 = vadd.f32 %v1258, %v1338
        %v1347 = vadd.f32 %v1259, %v1340
        %v1348 = vxor.u32 %v1344, 2147483648
        %v1349 = vxor.u32 %v1345, 2147483648
        %v1350 = vxor.u32 %v1346, 2147483648
        %v1351 = vmul.f32 %v1348, 1.442695
        %v1352 = vpow.pop %v1351
        %v1353 = vmul.f32 %v1349, 1.442695
        %v1354 = vpow.pop %v1353
        %v1355 = vmul.f32 %v1350, 1.442695
        %v1356 = vpow.pop %v1355
        %v1357 = vadd.f32 %v1352, 1.0
        %v1358 = vadd.f32 %v1354, 1.0
        %v1359 = vadd.f32 %v1356, 1.0
        %v1360 = vrcp.pop %v1357
        %v1361 = vmul.f32 1.0, %v1360
        %v1362 = vrcp.pop %v1358
        %v1363 = vmul.f32 1.0, %v1362
        %v1364 = vrcp.pop %v1359
        %v1365 = vmul.f32 1.0, %v1364
        %v1366 = vtanh.pop %v1347
        %v1367 = vld [vmem:[#allocation5] sm:$0xff]
        %v1368 = vmul.f32 %v1363, %v1367
        %v1369 = vmul.f32 %v1361, %v1366
        %v1370 = vadd.f32 %v1368, %v1369
        %v1371 = vtanh.pop %v1370
        %v1372 = vmul.f32 %v1365, %v1371
        %1373 = vst [vmem:[#allocation5] sm:$0xff] %v1370
        %1374 = vst [vmem:[#allocation4] sm:$0xff] %v1372
        %s1375 = scalar_lea.vmem [#allocation2], 16
        %1376 = vst [vmem:[%s1375] sm:$0xff] %v1372
        %s1377 = scalar_lea.vmem [#allocation3], 96
        %v1378 = vld [vmem:[%s1377] sm:$0xff]
        %v1379 = vld [vmem:[%s1377 + $0x8] sm:$0xff]
        %v1380 = vld [vmem:[%s1377 + $0x10] sm:$0xff]
        %v1381 = vld [vmem:[%s1377 + $0x18] sm:$0xff]
        %v1382 = vld [vmem:[#allocation4] sm:$0xff]
        %v1383 = vpack.c.bf16 %v1382, %v1382
        %1384 = vmatprep.subr.bf16.mxu0 %v984
        %1385 = vmatpush1.bf16.msra.mxu0 %v983
        %1386 = vmatprep.subr.bf16.mxu0 %v980
        %1387 = vmatpush1.bf16.msra.mxu0 %v979
        %1388 = vmatprep.subr.bf16.mxu0 %v976
        %1389 = vmatpush1.bf16.msra.mxu0 %v975
        %1390 = vmatprep.subr.bf16.mxu0 %v972
        %1391 = vmatpush1.bf16.msra.mxu0 %v971
        %1392 = vmatprep.subr.bf16.mxu0 %v968
        %1393 = vmatpush1.bf16.msra.mxu0 %v967
        %1394 = vmatprep.subr.bf16.mxu0 %v964
        %1395 = vmatpush1.bf16.msra.mxu0 %v963
        %1396 = vmatprep.subr.bf16.mxu0 %v960
        %1397 = vmatpush1.bf16.msra.mxu0 %v959
        %1398 = vmatprep.subr.bf16.mxu0 %v956
        %1399 = vmatpush1.bf16.msra.mxu0 %v955
        %1400 = vmatprep.subr.bf16.mxu0 0
        %1401 = vmatpush2.bf16.msra.mxu0 0
        %1402 = vmatprep.subr.bf16.mxu0 0
        %1403 = vmatpush2.bf16.msra.mxu0 0
        %1404 = vmatprep.subr.bf16.mxu0 0
        %1405 = vmatpush2.bf16.msra.mxu0 0
        %1406 = vmatprep.subr.bf16.mxu0 0
        %1407 = vmatpush2.bf16.msra.mxu0 0
        %1408 = vmatprep.subr.bf16.mxu0 0
        %1409 = vmatpush2.bf16.msra.mxu0 0
        %1410 = vmatprep.subr.bf16.mxu0 0
        %1411 = vmatpush2.bf16.msra.mxu0 0
        %1412 = vmatprep.subr.bf16.mxu0 0
        %1413 = vmatpush2.bf16.msra.mxu0 0
        %1414 = vmatprep.subr.bf16.mxu0 0
        %1415 = vmatpush2.bf16.msra.mxu0 0
        %1416 = vmatprep.mubr.bf16.mxu0 0
        %1417 = vmatmul.mubr.bf16.gmra.mxu0 %v1383
        %v1418 = vpop.f32.mrf.mxu0
        %v1419 = vadd.f32 0.0, %v1418
        %v1420 = vpop.f32.mrf.mxu0
        %v1421 = vadd.f32 0.0, %v1420
        %v1422 = vpop.f32.mrf.mxu0
        %v1423 = vpop.f32.mrf.mxu0
        %1424 = vdwg.mxu0
        %1425 = vmatprep.subr.bf16.mxu0 %v986
        %1426 = vmatpush1.bf16.msra.mxu0 %v985
        %1427 = vmatprep.subr.bf16.mxu0 %v982
        %1428 = vmatpush1.bf16.msra.mxu0 %v981
        %1429 = vmatprep.subr.bf16.mxu0 %v978
        %1430 = vmatpush1.bf16.msra.mxu0 %v977
        %1431 = vmatprep.subr.bf16.mxu0 %v974
        %1432 = vmatpush1.bf16.msra.mxu0 %v973
        %1433 = vmatprep.subr.bf16.mxu0 %v970
        %1434 = vmatpush1.bf16.msra.mxu0 %v969
        %1435 = vmatprep.subr.bf16.mxu0 %v966
        %1436 = vmatpush1.bf16.msra.mxu0 %v965
        %1437 = vmatprep.subr.bf16.mxu0 %v962
        %1438 = vmatpush1.bf16.msra.mxu0 %v961
        %1439 = vmatprep.subr.bf16.mxu0 %v958
        %1440 = vmatpush1.bf16.msra.mxu0 %v957
        %1441 = vmatprep.subr.bf16.mxu0 0
        %1442 = vmatpush2.bf16.msra.mxu0 0
        %1443 = vmatprep.subr.bf16.mxu0 0
        %1444 = vmatpush2.bf16.msra.mxu0 0
        %1445 = vmatprep.subr.bf16.mxu0 0
        %1446 = vmatpush2.bf16.msra.mxu0 0
        %1447 = vmatprep.subr.bf16.mxu0 0
        %1448 = vmatpush2.bf16.msra.mxu0 0
        %1449 = vmatprep.subr.bf16.mxu0 0
        %1450 = vmatpush2.bf16.msra.mxu0 0
        %1451 = vmatprep.subr.bf16.mxu0 0
        %1452 = vmatpush2.bf16.msra.mxu0 0
        %1453 = vmatprep.subr.bf16.mxu0 0
        %1454 = vmatpush2.bf16.msra.mxu0 0
        %1455 = vmatprep.subr.bf16.mxu0 0
        %1456 = vmatpush2.bf16.msra.mxu0 0
        %1457 = vmatprep.mubr.bf16.mxu0 0
        %1458 = vmatmul.mubr.bf16.gmra.mxu0 %v1383
        %v1459 = vpop.f32.mrf.mxu0
        %v1460 = vadd.f32 0.0, %v1459
        %v1461 = vpop.f32.mrf.mxu0
        %v1462 = vadd.f32 0.0, %v1461
        %v1463 = vpop.f32.mrf.mxu0
        %v1464 = vpop.f32.mrf.mxu0
        %1465 = vdwg.mxu0
        %v1466 = vadd.f32 %v1378, %v1419
        %v1467 = vadd.f32 %v1379, %v1421
        %v1468 = vadd.f32 %v1380, %v1460
        %v1469 = vadd.f32 %v1381, %v1462
        %v1470 = vxor.u32 %v1466, 2147483648
        %v1471 = vxor.u32 %v1467, 2147483648
        %v1472 = vxor.u32 %v1468, 2147483648
        %v1473 = vmul.f32 %v1470, 1.442695
        %v1474 = vpow.pop %v1473
        %v1475 = vmul.f32 %v1471, 1.442695
        %v1476 = vpow.pop %v1475
        %v1477 = vmul.f32 %v1472, 1.442695
        %v1478 = vpow.pop %v1477
        %v1479 = vadd.f32 %v1474, 1.0
        %v1480 = vadd.f32 %v1476, 1.0
        %v1481 = vadd.f32 %v1478, 1.0
        %v1482 = vrcp.pop %v1479
        %v1483 = vmul.f32 1.0, %v1482
        %v1484 = vrcp.pop %v1480
        %v1485 = vmul.f32 1.0, %v1484
        %v1486 = vrcp.pop %v1481
        %v1487 = vmul.f32 1.0, %v1486
        %v1488 = vtanh.pop %v1469
        %v1489 = vld [vmem:[#allocation5] sm:$0xff]
        %v1490 = vmul.f32 %v1485, %v1489
        %v1491 = vmul.f32 %v1483, %v1488
        %v1492 = vadd.f32 %v1490, %v1491
        %v1493 = vtanh.pop %v1492
        %v1494 = vmul.f32 %v1487, %v1493
        %1495 = vst [vmem:[#allocation5] sm:$0xff] %v1492
        %1496 = vst [vmem:[#allocation4] sm:$0xff] %v1494
        %s1497 = scalar_lea.vmem [#allocation2], 24
        %1498 = vst [vmem:[%s1497] sm:$0xff] %v1494
        %s1499 = scalar_lea.vmem [#allocation3], 128
        %v1500 = vld [vmem:[%s1499] sm:$0xff]
        %v1501 = vld [vmem:[%s1499 + $0x8] sm:$0xff]
        %v1502 = vld [vmem:[%s1499 + $0x10] sm:$0xff]
        %v1503 = vld [vmem:[%s1499 + $0x18] sm:$0xff]
        %v1504 = vld [vmem:[#allocation4] sm:$0xff]
        %v1505 = vpack.c.bf16 %v1504, %v1504
        %1506 = vmatprep.subr.bf16.mxu0 %v984
        %1507 = vmatpush1.bf16.msra.mxu0 %v983
        %1508 = vmatprep.subr.bf16.mxu0 %v980
        %1509 = vmatpush1.bf16.msra.mxu0 %v979
        %1510 = vmatprep.subr.bf16.mxu0 %v976
        %1511 = vmatpush1.bf16.msra.mxu0 %v975
        %1512 = vmatprep.subr.bf16.mxu0 %v972
        %1513 = vmatpush1.bf16.msra.mxu0 %v971
        %1514 = vmatprep.subr.bf16.mxu0 %v968
        %1515 = vmatpush1.bf16.msra.mxu0 %v967
        %1516 = vmatprep.subr.bf16.mxu0 %v964
        %1517 = vmatpush1.bf16.msra.mxu0 %v963
        %1518 = vmatprep.subr.bf16.mxu0 %v960
        %1519 = vmatpush1.bf16.msra.mxu0 %v959
        %1520 = vmatprep.subr.bf16.mxu0 %v956
        %1521 = vmatpush1.bf16.msra.mxu0 %v955
        %1522 = vmatprep.subr.bf16.mxu0 0
        %1523 = vmatpush2.bf16.msra.mxu0 0
        %1524 = vmatprep.subr.bf16.mxu0 0
        %1525 = vmatpush2.bf16.msra.mxu0 0
        %1526 = vmatprep.subr.bf16.mxu0 0
        %1527 = vmatpush2.bf16.msra.mxu0 0
        %1528 = vmatprep.subr.bf16.mxu0 0
        %1529 = vmatpush2.bf16.msra.mxu0 0
        %1530 = vmatprep.subr.bf16.mxu0 0
        %1531 = vmatpush2.bf16.msra.mxu0 0
        %1532 = vmatprep.subr.bf16.mxu0 0
        %1533 = vmatpush2.bf16.msra.mxu0 0
        %1534 = vmatprep.subr.bf16.mxu0 0
        %1535 = vmatpush2.bf16.msra.mxu0 0
        %1536 = vmatprep.subr.bf16.mxu0 0
        %1537 = vmatpush2.bf16.msra.mxu0 0
        %1538 = vmatprep.mubr.bf16.mxu0 0
        %1539 = vmatmul.mubr.bf16.gmra.mxu0 %v1505
        %v1540 = vpop.f32.mrf.mxu0
        %v1541 = vadd.f32 0.0, %v1540
        %v1542 = vpop.f32.mrf.mxu0
        %v1543 = vadd.f32 0.0, %v1542
        %v1544 = vpop.f32.mrf.mxu0
        %v1545 = vpop.f32.mrf.mxu0
        %1546 = vdwg.mxu0
        %1547 = vmatprep.subr.bf16.mxu0 %v986
        %1548 = vmatpush1.bf16.msra.mxu0 %v985
        %1549 = vmatprep.subr.bf16.mxu0 %v982
        %1550 = vmatpush1.bf16.msra.mxu0 %v981
        %1551 = vmatprep.subr.bf16.mxu0 %v978
        %1552 = vmatpush1.bf16.msra.mxu0 %v977
        %1553 = vmatprep.subr.bf16.mxu0 %v974
        %1554 = vmatpush1.bf16.msra.mxu0 %v973
        %1555 = vmatprep.subr.bf16.mxu0 %v970
        %1556 = vmatpush1.bf16.msra.mxu0 %v969
        %1557 = vmatprep.subr.bf16.mxu0 %v966
        %1558 = vmatpush1.bf16.msra.mxu0 %v965
        %1559 = vmatprep.subr.bf16.mxu0 %v962
        %1560 = vmatpush1.bf16.msra.mxu0 %v961
        %1561 = vmatprep.subr.bf16.mxu0 %v958
        %1562 = vmatpush1.bf16.msra.mxu0 %v957
        %1563 = vmatprep.subr.bf16.mxu0 0
        %1564 = vmatpush2.bf16.msra.mxu0 0
        %1565 = vmatprep.subr.bf16.mxu0 0
        %1566 = vmatpush2.bf16.msra.mxu0 0
        %1567 = vmatprep.subr.bf16.mxu0 0
        %1568 = vmatpush2.bf16.msra.mxu0 0
        %1569 = vmatprep.subr.bf16.mxu0 0
        %1570 = vmatpush2.bf16.msra.mxu0 0
        %1571 = vmatprep.subr.bf16.mxu0 0
        %1572 = vmatpush2.bf16.msra.mxu0 0
        %1573 = vmatprep.subr.bf16.mxu0 0
        %1574 = vmatpush2.bf16.msra.mxu0 0
        %1575 = vmatprep.subr.bf16.mxu0 0
        %1576 = vmatpush2.bf16.msra.mxu0 0
        %1577 = vmatprep.subr.bf16.mxu0 0
        %1578 = vmatpush2.bf16.msra.mxu0 0
        %1579 = vmatprep.mubr.bf16.mxu0 0
        %1580 = vmatmul.mubr.bf16.gmra.mxu0 %v1505
        %v1581 = vpop.f32.mrf.mxu0
        %v1582 = vadd.f32 0.0, %v1581
        %v1583 = vpop.f32.mrf.mxu0
        %v1584 = vadd.f32 0.0, %v1583
        %v1585 = vpop.f32.mrf.mxu0
        %v1586 = vpop.f32.mrf.mxu0
        %1587 = vdwg.mxu0
        %v1588 = vadd.f32 %v1500, %v1541
        %v1589 = vadd.f32 %v1501, %v1543
        %v1590 = vadd.f32 %v1502, %v1582
        %v1591 = vadd.f32 %v1503, %v1584
        %v1592 = vxor.u32 %v1588, 2147483648
        %v1593 = vxor.u32 %v1589, 2147483648
        %v1594 = vxor.u32 %v1590, 2147483648
        %v1595 = vmul.f32 %v1592, 1.442695
        %v1596 = vpow.pop %v1595
        %v1597 = vmul.f32 %v1593, 1.442695
        %v1598 = vpow.pop %v1597
        %v1599 = vmul.f32 %v1594, 1.442695
        %v1600 = vpow.pop %v1599
        %v1601 = vadd.f32 %v1596, 1.0
        %v1602 = vadd.f32 %v1598, 1.0
        %v1603 = vadd.f32 %v1600, 1.0
        %v1604 = vrcp.pop %v1601
        %v1605 = vmul.f32 1.0, %v1604
        %v1606 = vrcp.pop %v1602
        %v1607 = vmul.f32 1.0, %v1606
        %v1608 = vrcp.pop %v1603
        %v1609 = vmul.f32 1.0, %v1608
        %v1610 = vtanh.pop %v1591
        %v1611 = vld [vmem:[#allocation5] sm:$0xff]
        %v1612 = vmul.f32 %v1607, %v1611
        %v1613 = vmul.f32 %v1605, %v1610
        %v1614 = vadd.f32 %v1612, %v1613
        %v1615 = vtanh.pop %v1614
        %v1616 = vmul.f32 %v1609, %v1615
        %1617 = vst [vmem:[#allocation5] sm:$0xff] %v1614
        %1618 = vst [vmem:[#allocation4] sm:$0xff] %v1616
        %s1619 = scalar_lea.vmem [#allocation2], 32
        %1620 = vst [vmem:[%s1619] sm:$0xff] %v1616
        %s1621 = scalar_lea.vmem [#allocation3], 160
        %v1622 = vld [vmem:[%s1621] sm:$0xff]
        %v1623 = vld [vmem:[%s1621 + $0x8] sm:$0xff]
        %v1624 = vld [vmem:[%s1621 + $0x10] sm:$0xff]
        %v1625 = vld [vmem:[%s1621 + $0x18] sm:$0xff]
        %v1626 = vld [vmem:[#allocation4] sm:$0xff]
        %v1627 = vpack.c.bf16 %v1626, %v1626
        %1628 = vmatprep.subr.bf16.mxu0 %v984
        %1629 = vmatpush1.bf16.msra.mxu0 %v983
        %1630 = vmatprep.subr.bf16.mxu0 %v980
        %1631 = vmatpush1.bf16.msra.mxu0 %v979
        %1632 = vmatprep.subr.bf16.mxu0 %v976
        %1633 = vmatpush1.bf16.msra.mxu0 %v975
        %1634 = vmatprep.subr.bf16.mxu0 %v972
        %1635 = vmatpush1.bf16.msra.mxu0 %v971
        %1636 = vmatprep.subr.bf16.mxu0 %v968
        %1637 = vmatpush1.bf16.msra.mxu0 %v967
        %1638 = vmatprep.subr.bf16.mxu0 %v964
        %1639 = vmatpush1.bf16.msra.mxu0 %v963
        %1640 = vmatprep.subr.bf16.mxu0 %v960
        %1641 = vmatpush1.bf16.msra.mxu0 %v959
        %1642 = vmatprep.subr.bf16.mxu0 %v956
        %1643 = vmatpush1.bf16.msra.mxu0 %v955
        %1644 = vmatprep.subr.bf16.mxu0 0
        %1645 = vmatpush2.bf16.msra.mxu0 0
        %1646 = vmatprep.subr.bf16.mxu0 0
        %1647 = vmatpush2.bf16.msra.mxu0 0
        %1648 = vmatprep.subr.bf16.mxu0 0
        %1649 = vmatpush2.bf16.msra.mxu0 0
        %1650 = vmatprep.subr.bf16.mxu0 0
        %1651 = vmatpush2.bf16.msra.mxu0 0
        %1652 = vmatprep.subr.bf16.mxu0 0
        %1653 = vmatpush2.bf16.msra.mxu0 0
        %1654 = vmatprep.subr.bf16.mxu0 0
        %1655 = vmatpush2.bf16.msra.mxu0 0
        %1656 = vmatprep.subr.bf16.mxu0 0
        %1657 = vmatpush2.bf16.msra.mxu0 0
        %1658 = vmatprep.subr.bf16.mxu0 0
        %1659 = vmatpush2.bf16.msra.mxu0 0
        %1660 = vmatprep.mubr.bf16.mxu0 0
        %1661 = vmatmul.mubr.bf16.gmra.mxu0 %v1627
        %v1662 = vpop.f32.mrf.mxu0
        %v1663 = vadd.f32 0.0, %v1662
        %v1664 = vpop.f32.mrf.mxu0
        %v1665 = vadd.f32 0.0, %v1664
        %v1666 = vpop.f32.mrf.mxu0
        %v1667 = vpop.f32.mrf.mxu0
        %1668 = vdwg.mxu0
        %1669 = vmatprep.subr.bf16.mxu0 %v986
        %1670 = vmatpush1.bf16.msra.mxu0 %v985
        %1671 = vmatprep.subr.bf16.mxu0 %v982
        %1672 = vmatpush1.bf16.msra.mxu0 %v981
        %1673 = vmatprep.subr.bf16.mxu0 %v978
        %1674 = vmatpush1.bf16.msra.mxu0 %v977
        %1675 = vmatprep.subr.bf16.mxu0 %v974
        %1676 = vmatpush1.bf16.msra.mxu0 %v973
        %1677 = vmatprep.subr.bf16.mxu0 %v970
        %1678 = vmatpush1.bf16.msra.mxu0 %v969
        %1679 = vmatprep.subr.bf16.mxu0 %v966
        %1680 = vmatpush1.bf16.msra.mxu0 %v965
        %1681 = vmatprep.subr.bf16.mxu0 %v962
        %1682 = vmatpush1.bf16.msra.mxu0 %v961
        %1683 = vmatprep.subr.bf16.mxu0 %v958
        %1684 = vmatpush1.bf16.msra.mxu0 %v957
        %1685 = vmatprep.subr.bf16.mxu0 0
        %1686 = vmatpush2.bf16.msra.mxu0 0
        %1687 = vmatprep.subr.bf16.mxu0 0
        %1688 = vmatpush2.bf16.msra.mxu0 0
        %1689 = vmatprep.subr.bf16.mxu0 0
        %1690 = vmatpush2.bf16.msra.mxu0 0
        %1691 = vmatprep.subr.bf16.mxu0 0
        %1692 = vmatpush2.bf16.msra.mxu0 0
        %1693 = vmatprep.subr.bf16.mxu0 0
        %1694 = vmatpush2.bf16.msra.mxu0 0
        %1695 = vmatprep.subr.bf16.mxu0 0
        %1696 = vmatpush2.bf16.msra.mxu0 0
        %1697 = vmatprep.subr.bf16.mxu0 0
        %1698 = vmatpush2.bf16.msra.mxu0 0
        %1699 = vmatprep.subr.bf16.mxu0 0
        %1700 = vmatpush2.bf16.msra.mxu0 0
        %1701 = vmatprep.mubr.bf16.mxu0 0
        %1702 = vmatmul.mubr.bf16.gmra.mxu0 %v1627
        %v1703 = vpop.f32.mrf.mxu0
        %v1704 = vadd.f32 0.0, %v1703
        %v1705 = vpop.f32.mrf.mxu0
        %v1706 = vadd.f32 0.0, %v1705
        %v1707 = vpop.f32.mrf.mxu0
        %v1708 = vpop.f32.mrf.mxu0
        %1709 = vdwg.mxu0
        %v1710 = vadd.f32 %v1622, %v1663
        %v1711 = vadd.f32 %v1623, %v1665
        %v1712 = vadd.f32 %v1624, %v1704
        %v1713 = vadd.f32 %v1625, %v1706
        %v1714 = vxor.u32 %v1710, 2147483648
        %v1715 = vxor.u32 %v1711, 2147483648
        %v1716 = vxor.u32 %v1712, 2147483648
        %v1717 = vmul.f32 %v1714, 1.442695
        %v1718 = vpow.pop %v1717
        %v1719 = vmul.f32 %v1715, 1.442695
        %v1720 = vpow.pop %v1719
        %v1721 = vmul.f32 %v1716, 1.442695
        %v1722 = vpow.pop %v1721
        %v1723 = vadd.f32 %v1718, 1.0
        %v1724 = vadd.f32 %v1720, 1.0
        %v1725 = vadd.f32 %v1722, 1.0
        %v1726 = vrcp.pop %v1723
        %v1727 = vmul.f32 1.0, %v1726
        %v1728 = vrcp.pop %v1724
        %v1729 = vmul.f32 1.0, %v1728
        %v1730 = vrcp.pop %v1725
        %v1731 = vmul.f32 1.0, %v1730
        %v1732 = vtanh.pop %v1713
        %v1733 = vld [vmem:[#allocation5] sm:$0xff]
        %v1734 = vmul.f32 %v1729, %v1733
        %v1735 = vmul.f32 %v1727, %v1732
        %v1736 = vadd.f32 %v1734, %v1735
        %v1737 = vtanh.pop %v1736
        %v1738 = vmul.f32 %v1731, %v1737
        %1739 = vst [vmem:[#allocation5] sm:$0xff] %v1736
        %1740 = vst [vmem:[#allocation4] sm:$0xff] %v1738
        %s1741 = scalar_lea.vmem [#allocation2], 40
        %1742 = vst [vmem:[%s1741] sm:$0xff] %v1738
        %s1743 = scalar_lea.vmem [#allocation3], 192
        %v1744 = vld [vmem:[%s1743] sm:$0xff]
        %v1745 = vld [vmem:[%s1743 + $0x8] sm:$0xff]
        %v1746 = vld [vmem:[%s1743 + $0x10] sm:$0xff]
        %v1747 = vld [vmem:[%s1743 + $0x18] sm:$0xff]
        %v1748 = vld [vmem:[#allocation4] sm:$0xff]
        %v1749 = vpack.c.bf16 %v1748, %v1748
        %1750 = vmatprep.subr.bf16.mxu0 %v984
        %1751 = vmatpush1.bf16.msra.mxu0 %v983
        %1752 = vmatprep.subr.bf16.mxu0 %v980
        %1753 = vmatpush1.bf16.msra.mxu0 %v979
        %1754 = vmatprep.subr.bf16.mxu0 %v976
        %1755 = vmatpush1.bf16.msra.mxu0 %v975
        %1756 = vmatprep.subr.bf16.mxu0 %v972
        %1757 = vmatpush1.bf16.msra.mxu0 %v971
        %1758 = vmatprep.subr.bf16.mxu0 %v968
        %1759 = vmatpush1.bf16.msra.mxu0 %v967
        %1760 = vmatprep.subr.bf16.mxu0 %v964
        %1761 = vmatpush1.bf16.msra.mxu0 %v963
        %1762 = vmatprep.subr.bf16.mxu0 %v960
        %1763 = vmatpush1.bf16.msra.mxu0 %v959
        %1764 = vmatprep.subr.bf16.mxu0 %v956
        %1765 = vmatpush1.bf16.msra.mxu0 %v955
        %1766 = vmatprep.subr.bf16.mxu0 0
        %1767 = vmatpush2.bf16.msra.mxu0 0
        %1768 = vmatprep.subr.bf16.mxu0 0
        %1769 = vmatpush2.bf16.msra.mxu0 0
        %1770 = vmatprep.subr.bf16.mxu0 0
        %1771 = vmatpush2.bf16.msra.mxu0 0
        %1772 = vmatprep.subr.bf16.mxu0 0
        %1773 = vmatpush2.bf16.msra.mxu0 0
        %1774 = vmatprep.subr.bf16.mxu0 0
        %1775 = vmatpush2.bf16.msra.mxu0 0
        %1776 = vmatprep.subr.bf16.mxu0 0
        %1777 = vmatpush2.bf16.msra.mxu0 0
        %1778 = vmatprep.subr.bf16.mxu0 0
        %1779 = vmatpush2.bf16.msra.mxu0 0
        %1780 = vmatprep.subr.bf16.mxu0 0
        %1781 = vmatpush2.bf16.msra.mxu0 0
        %1782 = vmatprep.mubr.bf16.mxu0 0
        %1783 = vmatmul.mubr.bf16.gmra.mxu0 %v1749
        %v1784 = vpop.f32.mrf.mxu0
        %v1785 = vadd.f32 0.0, %v1784
        %v1786 = vpop.f32.mrf.mxu0
        %v1787 = vadd.f32 0.0, %v1786
        %v1788 = vpop.f32.mrf.mxu0
        %v1789 = vpop.f32.mrf.mxu0
        %1790 = vdwg.mxu0
        %1791 = vmatprep.subr.bf16.mxu0 %v986
        %1792 = vmatpush1.bf16.msra.mxu0 %v985
        %1793 = vmatprep.subr.bf16.mxu0 %v982
        %1794 = vmatpush1.bf16.msra.mxu0 %v981
        %1795 = vmatprep.subr.bf16.mxu0 %v978
        %1796 = vmatpush1.bf16.msra.mxu0 %v977
        %1797 = vmatprep.subr.bf16.mxu0 %v974
        %1798 = vmatpush1.bf16.msra.mxu0 %v973
        %1799 = vmatprep.subr.bf16.mxu0 %v970
        %1800 = vmatpush1.bf16.msra.mxu0 %v969
        %1801 = vmatprep.subr.bf16.mxu0 %v966
        %1802 = vmatpush1.bf16.msra.mxu0 %v965
        %1803 = vmatprep.subr.bf16.mxu0 %v962
        %1804 = vmatpush1.bf16.msra.mxu0 %v961
        %1805 = vmatprep.subr.bf16.mxu0 %v958
        %1806 = vmatpush1.bf16.msra.mxu0 %v957
        %1807 = vmatprep.subr.bf16.mxu0 0
        %1808 = vmatpush2.bf16.msra.mxu0 0
        %1809 = vmatprep.subr.bf16.mxu0 0
        %1810 = vmatpush2.bf16.msra.mxu0 0
        %1811 = vmatprep.subr.bf16.mxu0 0
        %1812 = vmatpush2.bf16.msra.mxu0 0
        %1813 = vmatprep.subr.bf16.mxu0 0
        %1814 = vmatpush2.bf16.msra.mxu0 0
        %1815 = vmatprep.subr.bf16.mxu0 0
        %1816 = vmatpush2.bf16.msra.mxu0 0
        %1817 = vmatprep.subr.bf16.mxu0 0
        %1818 = vmatpush2.bf16.msra.mxu0 0
        %1819 = vmatprep.subr.bf16.mxu0 0
        %1820 = vmatpush2.bf16.msra.mxu0 0
        %1821 = vmatprep.subr.bf16.mxu0 0
        %1822 = vmatpush2.bf16.msra.mxu0 0
        %1823 = vmatprep.mubr.bf16.mxu0 0
        %1824 = vmatmul.mubr.bf16.gmra.mxu0 %v1749
        %v1825 = vpop.f32.mrf.mxu0
        %v1826 = vadd.f32 0.0, %v1825
        %v1827 = vpop.f32.mrf.mxu0
        %v1828 = vadd.f32 0.0, %v1827
        %v1829 = vpop.f32.mrf.mxu0
        %v1830 = vpop.f32.mrf.mxu0
        %1831 = vdwg.mxu0
        %v1832 = vadd.f32 %v1744, %v1785
        %v1833 = vadd.f32 %v1745, %v1787
        %v1834 = vadd.f32 %v1746, %v1826
        %v1835 = vadd.f32 %v1747, %v1828
        %v1836 = vxor.u32 %v1832, 2147483648
        %v1837 = vxor.u32 %v1833, 2147483648
        %v1838 = vxor.u32 %v1834, 2147483648
        %v1839 = vmul.f32 %v1836, 1.442695
        %v1840 = vpow.pop %v1839
        %v1841 = vmul.f32 %v1837, 1.442695
        %v1842 = vpow.pop %v1841
        %v1843 = vmul.f32 %v1838, 1.442695
        %v1844 = vpow.pop %v1843
        %v1845 = vadd.f32 %v1840, 1.0
        %v1846 = vadd.f32 %v1842, 1.0
        %v1847 = vadd.f32 %v1844, 1.0
        %v1848 = vrcp.pop %v1845
        %v1849 = vmul.f32 1.0, %v1848
        %v1850 = vrcp.pop %v1846
        %v1851 = vmul.f32 1.0, %v1850
        %v1852 = vrcp.pop %v1847
        %v1853 = vmul.f32 1.0, %v1852
        %v1854 = vtanh.pop %v1835
        %v1855 = vld [vmem:[#allocation5] sm:$0xff]
        %v1856 = vmul.f32 %v1851, %v1855
        %v1857 = vmul.f32 %v1849, %v1854
        %v1858 = vadd.f32 %v1856, %v1857
        %v1859 = vtanh.pop %v1858
        %v1860 = vmul.f32 %v1853, %v1859
        %1861 = vst [vmem:[#allocation5] sm:$0xff] %v1858
        %1862 = vst [vmem:[#allocation4] sm:$0xff] %v1860
        %s1863 = scalar_lea.vmem [#allocation2], 48
        %1864 = vst [vmem:[%s1863] sm:$0xff] %v1860
        %s1865 = scalar_lea.vmem [#allocation3], 224
        %v1866 = vld [vmem:[%s1865] sm:$0xff]
        %v1867 = vld [vmem:[%s1865 + $0x8] sm:$0xff]
        %v1868 = vld [vmem:[%s1865 + $0x10] sm:$0xff]
        %v1869 = vld [vmem:[%s1865 + $0x18] sm:$0xff]
        %v1870 = vld [vmem:[#allocation4] sm:$0xff]
        %v1871 = vpack.c.bf16 %v1870, %v1870
        %1872 = vmatprep.subr.bf16.mxu0 %v984
        %1873 = vmatpush1.bf16.msra.mxu0 %v983
        %1874 = vmatprep.subr.bf16.mxu0 %v980
        %1875 = vmatpush1.bf16.msra.mxu0 %v979
        %1876 = vmatprep.subr.bf16.mxu0 %v976
        %1877 = vmatpush1.bf16.msra.mxu0 %v975
        %1878 = vmatprep.subr.bf16.mxu0 %v972
        %1879 = vmatpush1.bf16.msra.mxu0 %v971
        %1880 = vmatprep.subr.bf16.mxu0 %v968
        %1881 = vmatpush1.bf16.msra.mxu0 %v967
        %1882 = vmatprep.subr.bf16.mxu0 %v964
        %1883 = vmatpush1.bf16.msra.mxu0 %v963
        %1884 = vmatprep.subr.bf16.mxu0 %v960
        %1885 = vmatpush1.bf16.msra.mxu0 %v959
        %1886 = vmatprep.subr.bf16.mxu0 %v956
        %1887 = vmatpush1.bf16.msra.mxu0 %v955
        %1888 = vmatprep.subr.bf16.mxu0 0
        %1889 = vmatpush2.bf16.msra.mxu0 0
        %1890 = vmatprep.subr.bf16.mxu0 0
        %1891 = vmatpush2.bf16.msra.mxu0 0
        %1892 = vmatprep.subr.bf16.mxu0 0
        %1893 = vmatpush2.bf16.msra.mxu0 0
        %1894 = vmatprep.subr.bf16.mxu0 0
        %1895 = vmatpush2.bf16.msra.mxu0 0
        %1896 = vmatprep.subr.bf16.mxu0 0
        %1897 = vmatpush2.bf16.msra.mxu0 0
        %1898 = vmatprep.subr.bf16.mxu0 0
        %1899 = vmatpush2.bf16.msra.mxu0 0
        %1900 = vmatprep.subr.bf16.mxu0 0
        %1901 = vmatpush2.bf16.msra.mxu0 0
        %1902 = vmatprep.subr.bf16.mxu0 0
        %1903 = vmatpush2.bf16.msra.mxu0 0
        %1904 = vmatprep.mubr.bf16.mxu0 0
        %1905 = vmatmul.mubr.bf16.gmra.mxu0 %v1871
        %v1906 = vpop.f32.mrf.mxu0
        %v1907 = vadd.f32 0.0, %v1906
        %v1908 = vpop.f32.mrf.mxu0
        %v1909 = vadd.f32 0.0, %v1908
        %v1910 = vpop.f32.mrf.mxu0
        %v1911 = vpop.f32.mrf.mxu0
        %1912 = vdwg.mxu0
        %1913 = vmatprep.subr.bf16.mxu0 %v986
        %1914 = vmatpush1.bf16.msra.mxu0 %v985
        %1915 = vmatprep.subr.bf16.mxu0 %v982
        %1916 = vmatpush1.bf16.msra.mxu0 %v981
        %1917 = vmatprep.subr.bf16.mxu0 %v978
        %1918 = vmatpush1.bf16.msra.mxu0 %v977
        %1919 = vmatprep.subr.bf16.mxu0 %v974
        %1920 = vmatpush1.bf16.msra.mxu0 %v973
        %1921 = vmatprep.subr.bf16.mxu0 %v970
        %1922 = vmatpush1.bf16.msra.mxu0 %v969
        %1923 = vmatprep.subr.bf16.mxu0 %v966
        %1924 = vmatpush1.bf16.msra.mxu0 %v965
        %1925 = vmatprep.subr.bf16.mxu0 %v962
        %1926 = vmatpush1.bf16.msra.mxu0 %v961
        %1927 = vmatprep.subr.bf16.mxu0 %v958
        %1928 = vmatpush1.bf16.msra.mxu0 %v957
        %1929 = vmatprep.subr.bf16.mxu0 0
        %1930 = vmatpush2.bf16.msra.mxu0 0
        %1931 = vmatprep.subr.bf16.mxu0 0
        %1932 = vmatpush2.bf16.msra.mxu0 0
        %1933 = vmatprep.subr.bf16.mxu0 0
        %1934 = vmatpush2.bf16.msra.mxu0 0
        %1935 = vmatprep.subr.bf16.mxu0 0
        %1936 = vmatpush2.bf16.msra.mxu0 0
        %1937 = vmatprep.subr.bf16.mxu0 0
        %1938 = vmatpush2.bf16.msra.mxu0 0
        %1939 = vmatprep.subr.bf16.mxu0 0
        %1940 = vmatpush2.bf16.msra.mxu0 0
        %1941 = vmatprep.subr.bf16.mxu0 0
        %1942 = vmatpush2.bf16.msra.mxu0 0
        %1943 = vmatprep.subr.bf16.mxu0 0
        %1944 = vmatpush2.bf16.msra.mxu0 0
        %1945 = vmatprep.mubr.bf16.mxu0 0
        %1946 = vmatmul.mubr.bf16.gmra.mxu0 %v1871
        %v1947 = vpop.f32.mrf.mxu0
        %v1948 = vadd.f32 0.0, %v1947
        %v1949 = vpop.f32.mrf.mxu0
        %v1950 = vadd.f32 0.0, %v1949
        %v1951 = vpop.f32.mrf.mxu0
        %v1952 = vpop.f32.mrf.mxu0
        %1953 = vdwg.mxu0
        %v1954 = vadd.f32 %v1866, %v1907
        %v1955 = vadd.f32 %v1867, %v1909
        %v1956 = vadd.f32 %v1868, %v1948
        %v1957 = vadd.f32 %v1869, %v1950
        %v1958 = vxor.u32 %v1954, 2147483648
        %v1959 = vxor.u32 %v1955, 2147483648
        %v1960 = vxor.u32 %v1956, 2147483648
        %v1961 = vmul.f32 %v1958, 1.442695
        %v1962 = vpow.pop %v1961
        %v1963 = vmul.f32 %v1959, 1.442695
        %v1964 = vpow.pop %v1963
        %v1965 = vmul.f32 %v1960, 1.442695
        %v1966 = vpow.pop %v1965
        %v1967 = vadd.f32 %v1962, 1.0
        %v1968 = vadd.f32 %v1964, 1.0
        %v1969 = vadd.f32 %v1966, 1.0
        %v1970 = vrcp.pop %v1967
        %v1971 = vmul.f32 1.0, %v1970
        %v1972 = vrcp.pop %v1968
        %v1973 = vmul.f32 1.0, %v1972
        %v1974 = vrcp.pop %v1969
        %v1975 = vmul.f32 1.0, %v1974
        %v1976 = vtanh.pop %v1957
        %v1977 = vld [vmem:[#allocation5] sm:$0xff]
        %v1978 = vmul.f32 %v1973, %v1977
        %v1979 = vmul.f32 %v1971, %v1976
        %v1980 = vadd.f32 %v1978, %v1979
        %v1981 = vtanh.pop %v1980
        %v1982 = vmul.f32 %v1975, %v1981
        %1983 = vst [vmem:[#allocation5] sm:$0xff] %v1980
        %1984 = vst [vmem:[#allocation4] sm:$0xff] %v1982
        %s1985 = scalar_lea.vmem [#allocation2], 56
        %1986 = vst [vmem:[%s1985] sm:$0xff] %v1982
        %p1987 = scmp.eq.s32.totalorder %s25, 1
        // Predicated region
        $region69: #{tpu_custom_call.1} parent=43 // pred_check
          %p1988 = pneg %p1987
        $region70: #{tpu_custom_call.1} parent=43 // pred_check_branch
          %1990 = sbr.rel (%p1988) target = $region72
        $region71: #{tpu_custom_call.1} parent=43 // pred_region
          %v1991 = vld [vmem:[%s1741] sm:$0xff]
          %v1992 = vld [vmem:[%s1741 + $0x8] sm:$0xff]
          %v1993 = vld [vmem:[%s1741 + $0x10] sm:$0xff]
          %v1994 = vpack.c.bf16 %v1992, %v1991
          %v1995 = vpack.c.bf16 %v1993, %v1993
          %v1996 = vld [vmem:[#allocation14] sm:$0xf]
          %v1997 = vld [vmem:[#allocation14 + $0x4] sm:$0xf]
          %v1998 = vld [vmem:[#allocation14 + $0x8] sm:$0xf]
          %v1999 = vld [vmem:[#allocation14 + $0xc] sm:$0xf]
          %v2000 = vld [vmem:[#allocation14 + $0x10] sm:$0xf]
          %v2001 = vld [vmem:[#allocation14 + $0x14] sm:$0xf]
          %v2002 = vld [vmem:[#allocation14 + $0x18] sm:$0xf]
          %v2003 = vld [vmem:[#allocation14 + $0x1c] sm:$0xf]
          %v2004 = vld [vmem:[#allocation14 + $0x20] sm:$0xf]
          %v2005 = vld [vmem:[#allocation14 + $0x24] sm:$0xf]
          %v2006 = vld [vmem:[#allocation14 + $0x28] sm:$0xf]
          %v2007 = vld [vmem:[#allocation14 + $0x2c] sm:$0xf]
          %v2008 = vld [vmem:[#allocation14 + $0x30] sm:$0xf]
          %v2009 = vld [vmem:[#allocation14 + $0x34] sm:$0xf]
          %v2010 = vld [vmem:[#allocation14 + $0x38] sm:$0xf]
          %v2011 = vld [vmem:[#allocation14 + $0x3c] sm:$0xf]
          %v2028 = vunpack.c.l.b16 %v1996
          %v2029 = vunpack.c.l.b16 %v1997
          %v2030 = vunpack.c.l.b16 %v1998
          %v2031 = vunpack.c.l.b16 %v1999
          %v2032 = vunpack.c.l.b16 %v2000
          %v2033 = vunpack.c.l.b16 %v2001
          %v2034 = vunpack.c.l.b16 %v2002
          %v2035 = vunpack.c.l.b16 %v2003
          %v2036 = vunpack.c.l.b16 %v2004
          %v2037 = vunpack.c.l.b16 %v2005
          %v2038 = vunpack.c.l.b16 %v2006
          %v2039 = vunpack.c.l.b16 %v2007
          %v2040 = vunpack.c.l.b16 %v2008
          %v2041 = vunpack.c.l.b16 %v2009
          %v2042 = vunpack.c.l.b16 %v2010
          %v2043 = vunpack.c.l.b16 %v2011
          %v2044 = vpack.c.b16 %v2029, %v2028
          %v2045 = vpack.c.b16 %v2031, %v2030
          %v2046 = vpack.c.b16 %v2033, %v2032
          %v2047 = vpack.c.b16 %v2035, %v2034
          %v2048 = vpack.c.b16 %v2037, %v2036
          %v2049 = vpack.c.b16 %v2039, %v2038
          %v2050 = vpack.c.b16 %v2041, %v2040
          %v2051 = vpack.c.b16 %v2043, %v2042
          %2060 = vmatprep.subr.bf16.mxu0 0
          %2061 = vmatpush1.bf16.msra.mxu0 %v2051
          %2062 = vmatprep.subr.bf16.mxu0 0
          %2063 = vmatpush1.bf16.msra.mxu0 %v2050
          %2064 = vmatprep.subr.bf16.mxu0 0
          %2065 = vmatpush1.bf16.msra.mxu0 %v2049
          %2066 = vmatprep.subr.bf16.mxu0 0
          %2067 = vmatpush1.bf16.msra.mxu0 %v2048
          %2068 = vmatprep.subr.bf16.mxu0 0
          %2069 = vmatpush1.bf16.msra.mxu0 %v2047
          %2070 = vmatprep.subr.bf16.mxu0 0
          %2071 = vmatpush1.bf16.msra.mxu0 %v2046
          %2072 = vmatprep.subr.bf16.mxu0 0
          %2073 = vmatpush1.bf16.msra.mxu0 %v2045
          %2074 = vmatprep.subr.bf16.mxu0 0
          %2075 = vmatpush1.bf16.msra.mxu0 %v2044
          %2076 = vmatprep.subr.bf16.mxu0 0
          %2077 = vmatpush2.bf16.msra.mxu0 0
          %2078 = vmatprep.subr.bf16.mxu0 0
          %2079 = vmatpush2.bf16.msra.mxu0 0
          %2080 = vmatprep.subr.bf16.mxu0 0
          %2081 = vmatpush2.bf16.msra.mxu0 0
          %2082 = vmatprep.subr.bf16.mxu0 0
          %2083 = vmatpush2.bf16.msra.mxu0 0
          %2084 = vmatprep.subr.bf16.mxu0 0
          %2085 = vmatpush2.bf16.msra.mxu0 0
          %2086 = vmatprep.subr.bf16.mxu0 0
          %2087 = vmatpush2.bf16.msra.mxu0 0
          %2088 = vmatprep.subr.bf16.mxu0 0
          %2089 = vmatpush2.bf16.msra.mxu0 0
          %2090 = vmatprep.subr.bf16.mxu0 0
          %2091 = vmatpush2.bf16.msra.mxu0 0
          %2092 = vmatprep.mubr.bf16.mxu0 0
          %2093 = vmatmul.mubr.bf16.gmra.mxu0 %v1994
          %v2094 = vpop.f32.mrf.mxu0
          %v2095 = vadd.f32 0.0, %v2094
          %v2096 = vpop.f32.mrf.mxu0
          %v2097 = vpop.f32.mrf.mxu0
          %v2098 = vadd.f32 0.0, %v2097
          %v2099 = vpop.f32.mrf.mxu0
          %2100 = vmatprep.mubr.bf16.mxu0 0
          %2101 = vmatmul.mubr.bf16.gmra.mxu0 %v1995
          %v2102 = vpop.f32.mrf.mxu0
          %v2103 = vadd.f32 0.0, %v2102
          %v2104 = vpop.f32.mrf.mxu0
          %v2105 = vpop.f32.mrf.mxu0
          %v2106 = vpop.f32.mrf.mxu0
          %2107 = vdwg.mxu0
          %v2108 = vld [vmem:[%s5] sm:$0x1]
          %v2110 = vlaneseq
          %v2111 = vshrl.u32 %v2110, 7
          %v2112 = vsub.s32 0, %v2111
          %v2113 = vrot.slane %v2108, %v2112
          %v2115 = vadd.f32 %v2095, %v2113
          %v2116 = vadd.f32 %v2098, %v2113
          %v2117 = vadd.f32 %v2103, %v2113
          %2118 = vst [vmem:[#allocation15] sm:$0xff] %v2115
          %2119 = vst [vmem:[#allocation15 + $0x8] sm:$0xff] %v2116
          %2120 = vst [vmem:[#allocation15 + $0x10] sm:$0xff] %v2117
        $region72: #{tpu_custom_call.1} parent=43 // pred_fallthru
          _
        // Predicated region
        $region73: #{tpu_custom_call.1} parent=43 // pred_check
          %p2121 = pneg %p179
        $region74: #{tpu_custom_call.1} parent=43 // pred_check_branch
          %2123 = sbr.rel (%p2121) target = $region76
        $region75: #{tpu_custom_call.1} parent=43 // pred_region
          %s2125 = ssub.s32 384, 384
          %2126 = vsyncadd [#allocation8], %s2125
          %s2127 = sshll.u32 [#allocation15], 4
          %s2128 = int_to_ptr.vmem [resolvable:$true] %s2127
          %2133 = dma.vmem_to_hbm [thread:$0]  %s2128, 384, %s6, [#allocation8], 128, 128, 8
        $region76: #{tpu_custom_call.1} parent=43 // pred_fallthru
          _
        // Predicated region
        $region77: #{tpu_custom_call.1} parent=43 // pred_check
          %p2134 = pneg %p179
        $region78: #{tpu_custom_call.1} parent=43 // pred_check_branch
          %2136 = sbr.rel (%p2134) target = $region80
        $region79: #{tpu_custom_call.1} parent=43 // pred_region
          %2137 = dma.done [#allocation8], 384
        $region80: #{tpu_custom_call.1} parent=43 // pred_fallthru
          _
      $region44: #{tpu_custom_call.1} parent=5 // pred_fallthru
        _
      %p2138 = scmp.le.s32.totalorder 2, %s20
      // Predicated region
      $region81: #{tpu_custom_call.1} parent=5 // pred_check
        %p2139 = pneg %p2138
      $region82: #{tpu_custom_call.1} parent=5 // pred_check_branch
        %2141 = sbr.rel (%p2139) target = $region84
      $region83: #{tpu_custom_call.1} parent=5 // pred_region
        %s2142 = ssub.s32 %s20, 2
      $region84: #{tpu_custom_call.1} parent=5 // pred_fallthru
        _
    $region6: #{tpu_custom_call.1} parent=1 // loop_footer
      %s24 = sadd.s32 1, %s20
    $region7: #{tpu_custom_call.1} parent=1 // loop_footer_branch
      %19 = sbr.rel target = $region3
    $region8: #{tpu_custom_call.1} parent=1 // loop_exit
      _
    %2143 = vsyncpa [#allocation7], 1
    %s2144 = scalar_lea.sflag [#allocation7], 1
    %2145 = vsyncpa %s2144, 1
    %2146 = vsyncpa [#allocation10], 1
    %s2147 = scalar_lea.sflag [#allocation10], 1
    %2148 = vsyncpa %s2147, 1
    %2149 = vsyncpa [#allocation13], 1
    %s2150 = scalar_lea.sflag [#allocation13], 1
    %2151 = vsyncpa %s2150, 1
    %2152 = vsyncpa [#allocation8], 1
    %s2153 = scalar_lea.sflag [#allocation8], 1
    %2154 = vsyncpa %s2153, 1

</llo_original>
